<compile_context>
chip_gen: v7x
topology: tpu7x:2x2x1
jax: 0.10.0
libtpu: 0.0.40
codegen_flags: <defaults>
</compile_context>

<pallas_src>
import functools

import jax
import jax.numpy as jnp
from jax.experimental import pallas as pl
from jax.experimental.pallas import tpu as pltpu

D_IN = 20          # LSTM input_size
H = 40             # LSTM hidden_size = 20 * 2
HP = 128           # hidden width padded so each gate is one full 128-lane block
D_FC = 20          # fc out_features
NEG_SLOPE = 0.01   # F.leaky_relu default

# Padded-lane invariant (documented per review): lanes H..HP-1 of every gate stay
# exactly 0 throughout the recurrence because (a) initial h/c are 0, (b) the padded
# weight rows/cols and bias lanes are 0, so the padded pre-activations are 0, giving
# g = tanh(0) = 0 => c_pad = f*0 + i*0 = 0 and h_pad = o*tanh(0) = 0. Changing to a
# nonzero initial state or nonzero padding would break this.


def _leaky_relu(x):
    return jnp.where(x > 0, x, NEG_SLOPE * x)


def lstm_fc_kernel(x_ref, w_ih_ref, w_hh_ref, b_ref, w_head_ref, out_ref, xp_ref,
                   *, T, B, n_next):
    HP3 = 3 * HP

    # Input projection for ALL time steps in ONE MXU pass (hoisted out of the
    # serial recurrence) and parked in VMEM scratch so only ~4 gate vregs per
    # step are live inside the unrolled loop.
    xp_ref[...] = (jnp.dot(x_ref[...], w_ih_ref[...],
                           preferred_element_type=jnp.float32)
                   + b_ref[0:1, 0:4 * HP])                               # (T*B, 4*HP)

    # NOTE: ideally w_hh stays weight-stationary in the MXU across the 8 steps
    # (pltpu.matmul_push_rhs once + matmul_acc_lhs per step); left to the compiler
    # here.  On v7x the `xp + dot(h, w_hh)` form below can fold the add into the
    # MRB accumulate.
    w_hh = w_hh_ref[...]                                                 # (HP, 4*HP)

    def nonlin(gates):
        # Gate layout (reordered in the wrapper): [i | f | o | g], each HP lanes.
        # sigmoid(x) = 0.5*(tanh(0.5*x)+1): one EUP push per block, the muls/adds
        # ride free VPU slots.  One contiguous 3*HP slice for the sigmoid gates.
        s = 0.5 * (jnp.tanh(0.5 * gates[:, :HP3]) + 1.0)
        i = s[:, 0 * HP:1 * HP]
        f = s[:, 1 * HP:2 * HP]
        o = s[:, 2 * HP:3 * HP]
        g = jnp.tanh(gates[:, HP3:])
        return i, f, o, g

    # Peeled t = 0: h = c = 0, so the h @ w_hh matmul and the f*c term vanish.
    i, f, o, g = nonlin(xp_ref[pl.ds(0, B), :])
    c = i * g
    h = o * jnp.tanh(c)

    # T is small and static: fully unrolled recurrence, one MXU matmul per step,
    # constant sublane-aligned slice offsets into the VMEM scratch.
    for t in range(1, T):
        gates = xp_ref[pl.ds(t * B, B), :] + jnp.dot(
            h, w_hh, preferred_element_type=jnp.float32)                 # (B, 4*HP)
        i, f, o, g = nonlin(gates)
        c = f * c + i * g
        h = o * jnp.tanh(c)

    # Head: Linear(HP->128pad) + LeakyReLU, Linear(128pad->128pad) + LeakyReLU.
    # Padded output lanes are leaky_relu(0) = 0 and never read back.
    b_fc = b_ref[0:1, 4 * HP:5 * HP]
    b_fc2 = b_ref[0:1, 5 * HP:6 * HP]
    y = _leaky_relu(jnp.dot(h, w_head_ref[0],
                            preferred_element_type=jnp.float32) + b_fc)
    y = _leaky_relu(jnp.dot(y, w_head_ref[1],
                            preferred_element_type=jnp.float32) + b_fc2)
    # TODO(synk): nn.Dropout is identity in eval mode; training-mode dropout
    # (scaled Bernoulli mask) is intentionally not applied here.
    out_ref[...] = y[:, :n_next]


def pack_params(params, n_next):
    """Pre-transpose / pad / reorder all weights ONCE (outside the jitted forward)."""
    perm = [0, 1, 3, 2]   # PyTorch gate order (i, f, g, o) -> (i, f, o, g)

    def pack_gates(w_t):                       # (K, 4*H) -> (K, 4*HP)
        k = w_t.shape[0]
        w4 = w_t.reshape(k, 4, H)[:, perm, :]
        w4 = jnp.pad(w4, ((0, 0), (0, 0), (0, HP - H)))
        return w4.reshape(k, 4 * HP)

    w_ih_t = pack_gates(params["w_ih"].T)                                  # (D_IN, 4*HP)
    w_hh_t = jnp.pad(pack_gates(params["w_hh"].T), ((0, HP - H), (0, 0)))  # (HP, 4*HP)

    b4 = (params["b_ih"] + params["b_hh"]).reshape(4, H)[perm, :]
    b_gates = jnp.pad(b4, ((0, 0), (0, HP - H))).reshape(4 * HP)
    b_fc = jnp.pad(params["b_fc"], (0, HP - D_FC))
    b_fc2 = jnp.pad(params["b_fc2"], (0, HP - n_next))
    b_pack = jnp.concatenate([b_gates, b_fc, b_fc2]).reshape(1, 6 * HP)    # (1, 768)

    w_fc = jnp.pad(params["w_fc"].T, ((0, HP - H), (0, HP - D_FC)))        # (HP, HP)
    w_fc2 = jnp.pad(params["w_fc2"].T, ((0, HP - D_FC), (0, HP - n_next))) # (HP, HP)
    w_head = jnp.stack([w_fc, w_fc2], axis=0)                              # (2, HP, HP)

    return {"w_ih_t": w_ih_t, "w_hh_t": w_hh_t, "b_pack": b_pack, "w_head": w_head}


@functools.partial(jax.jit, static_argnames=("n_next",))
def model_forward(x, packed, n_next):
    """x: (B, T, 20) float32 -> (B, n_next) float32 (eval-mode forward)."""
    B, T, _ = x.shape

    # Time-major flatten so the input projection is one matmul (only per-call XLA op).
    x2d = jnp.transpose(x, (1, 0, 2)).reshape(T * B, D_IN)

    vmem = pl.BlockSpec(memory_space=pltpu.MemorySpace.VMEM)
    # NOTE(v7x): for many independent sequences, add a leading "parallel" batch grid
    # axis to shard across the two TensorCores; at a single B=8 call it is moot.
    return pl.pallas_call(
        functools.partial(lstm_fc_kernel, T=T, B=B, n_next=n_next),
        out_shape=jax.ShapeDtypeStruct((B, n_next), jnp.float32),
        in_specs=[vmem] * 5,
        out_specs=vmem,
        scratch_shapes=[pltpu.VMEM((T * B, 4 * HP), jnp.float32)],
    )(x2d, packed["w_ih_t"], packed["w_hh_t"], packed["b_pack"], packed["w_head"])


def ref_forward(x, params, n_next):
    """Pure-JAX reference replicating the PyTorch forward (eval-mode dropout)."""
    B, T, _ = x.shape

    def step(carry, x_t):
        h, c = carry
        gates = (x_t @ params["w_ih"].T + h @ params["w_hh"].T
                 + params["b_ih"] + params["b_hh"])
        i, f, g, o = jnp.split(gates, 4, axis=-1)
        i, f, o = jax.nn.sigmoid(i), jax.nn.sigmoid(f), jax.nn.sigmoid(o)
        g = jnp.tanh(g)
        c = f * c + i * g
        h = o * jnp.tanh(c)
        return (h, c), h

    init = (jnp.zeros((B, H), jnp.float32), jnp.zeros((B, H), jnp.float32))
    (h_last, _), _ = jax.lax.scan(step, init, jnp.transpose(x, (1, 0, 2)))
    y = _leaky_relu(h_last @ params["w_fc"].T + params["b_fc"])
    y = _leaky_relu(y @ params["w_fc2"].T + params["b_fc2"])
    return y


def init_params(key, n_next):
    ks = jax.random.split(key, 8)
    s_lstm = 1.0 / jnp.sqrt(H)
    s_fc = 1.0 / jnp.sqrt(H)
    s_fc2 = 1.0 / jnp.sqrt(D_FC)
    u = lambda k, shape, s: jax.random.uniform(k, shape, jnp.float32, -s, s)
    return {
        "w_ih": u(ks[0], (4 * H, D_IN), s_lstm),
        "w_hh": u(ks[1], (4 * H, H), s_lstm),
        "b_ih": u(ks[2], (4 * H,), s_lstm),
        "b_hh": u(ks[3], (4 * H,), s_lstm),
        "w_fc": u(ks[4], (D_FC, H), s_fc),
        "b_fc": u(ks[5], (D_FC,), s_fc),
        "w_fc2": u(ks[6], (n_next, D_FC), s_fc2),
        "b_fc2": u(ks[7], (n_next,), s_fc2),
    }


if __name__ == "__main__":
    B, T, n_next = 8, 8, 4
    key = jax.random.PRNGKey(0)
    k_x, k_p = jax.random.split(key)
    x = jax.random.normal(k_x, (B, T, D_IN), jnp.float32)
    params = init_params(k_p, n_next)

    packed = jax.tree_util.tree_map(jax.block_until_ready,
                                    pack_params(params, n_next))  # one-time repack

    out = jax.block_until_ready(model_forward(x, packed, n_next))
    ref = jax.block_until_ready(ref_forward(x, params, n_next))

    assert out.shape == (B, n_next), out.shape
    assert jnp.allclose(out, ref, atol=1e-4, rtol=1e-4), \
        f"max abs diff {jnp.max(jnp.abs(out - ref))}"
    print("KERNEL_OK")
</pallas_src>

<mosaic_0001>
module attributes {stable_mosaic.version = 11 : i64} {
  func.func @lstm_fc_kernel(%arg0: memref<64x20xf32, #tpu.memory_space<vmem>>, %arg1: memref<20x512xf32, #tpu.memory_space<vmem>>, %arg2: memref<128x512xf32, #tpu.memory_space<vmem>>, %arg3: memref<1x768xf32, #tpu.memory_space<vmem>>, %arg4: memref<2x128x128xf32, #tpu.memory_space<vmem>>, %arg5: memref<8x4xf32, #tpu.memory_space<vmem>>, %arg6: memref<64x512xf32, #tpu.memory_space<vmem>>) attributes {dimension_semantics = [], scalar_prefetch = 0 : i64, scratch_operands = 1 : i64, tpu.core_type = #tpu.core_type<tc>} {
    %c0 = arith.constant 0 : index
    %c0_0 = arith.constant 0 : index
    %0 = vector.load %arg0[%c0, %c0_0] : memref<64x20xf32, #tpu.memory_space<vmem>>, vector<64x20xf32>
    %c0_1 = arith.constant 0 : index
    %c0_2 = arith.constant 0 : index
    %1 = vector.load %arg1[%c0_1, %c0_2] : memref<20x512xf32, #tpu.memory_space<vmem>>, vector<20x512xf32>
    %cst = arith.constant dense<0.000000e+00> : vector<64x512xf32>
    %2 = tpu.matmul %0, %1, %cst {dimension_numbers = #tpu.dot_dimension_numbers<[1], [0], [0], [1], [0, 0, 1, 1], [], []>} : vector<64x20xf32>, vector<20x512xf32>, vector<64x512xf32> -> vector<64x512xf32>
    %c0_3 = arith.constant 0 : index
    %c0_4 = arith.constant 0 : index
    %3 = vector.load %arg3[%c0_3, %c0_4] : memref<1x768xf32, #tpu.memory_space<vmem>>, vector<1x512xf32>
    %4 = vector.broadcast %3 : vector<1x512xf32> to vector<64x512xf32>
    %5 = arith.addf %2, %4 : vector<64x512xf32>
    %c0_5 = arith.constant 0 : index
    %c0_6 = arith.constant 0 : index
    %6 = vector.load %arg6[%c0_5, %c0_6] : memref<64x512xf32, #tpu.memory_space<vmem>>, vector<64x512xf32>
    tpu.vector_store %arg6[%c0_5, %c0_6], %5 {strides = array<i32>} : memref<64x512xf32, #tpu.memory_space<vmem>>, vector<64x512xf32>,
    %c0_7 = arith.constant 0 : index
    %c0_8 = arith.constant 0 : index
    %7 = vector.load %arg2[%c0_7, %c0_8] : memref<128x512xf32, #tpu.memory_space<vmem>>, vector<128x512xf32>
    %c0_9 = arith.constant 0 : index
    %c0_10 = arith.constant 0 : index
    %8 = vector.load %arg6[%c0_9, %c0_10] : memref<64x512xf32, #tpu.memory_space<vmem>>, vector<8x512xf32>
    %9 = vector.extract_strided_slice %8 {offsets = [0, 0], sizes = [8, 384], strides = [1, 1]} : vector<8x512xf32> to vector<8x384xf32>
    %cst_11 = arith.constant 5.000000e-01 : f32
    %10 = vector.broadcast %cst_11 : f32 to vector<8x384xf32>
    %11 = arith.mulf %10, %9 : vector<8x384xf32>
    %12 = math.tanh %11 : vector<8x384xf32>
    %cst_12 = arith.constant 1.000000e+00 : f32
    %13 = vector.broadcast %cst_12 : f32 to vector<8x384xf32>
    %14 = arith.addf %12, %13 : vector<8x384xf32>
    %cst_13 = arith.constant 5.000000e-01 : f32
    %15 = vector.broadcast %cst_13 : f32 to vector<8x384xf32>
    %16 = arith.mulf %15, %14 : vector<8x384xf32>
    %17 = vector.extract_strided_slice %16 {offsets = [0, 0], sizes = [8, 128], strides = [1, 1]} : vector<8x384xf32> to vector<8x128xf32>
    %18 = vector.extract_strided_slice %16 {offsets = [0, 256], sizes = [8, 128], strides = [1, 1]} : vector<8x384xf32> to vector<8x128xf32>
    %19 = vector.extract_strided_slice %8 {offsets = [0, 384], sizes = [8, 128], strides = [1, 1]} : vector<8x512xf32> to vector<8x128xf32>
    %20 = math.tanh %19 : vector<8x128xf32>
    %21 = arith.mulf %17, %20 : vector<8x128xf32>
    %22 = math.tanh %21 : vector<8x128xf32>
    %23 = arith.mulf %18, %22 : vector<8x128xf32>
    %c8 = arith.constant 8 : index
    %c0_14 = arith.constant 0 : index
    %24 = vector.load %arg6[%c8, %c0_14] : memref<64x512xf32, #tpu.memory_space<vmem>>, vector<8x512xf32>
    %cst_15 = arith.constant dense<0.000000e+00> : vector<8x512xf32>
    %25 = tpu.matmul %23, %7, %cst_15 {dimension_numbers = #tpu.dot_dimension_numbers<[1], [0], [0], [1], [0, 0, 1, 1], [], []>} : vector<8x128xf32>, vector<128x512xf32>, vector<8x512xf32> -> vector<8x512xf32>
    %26 = arith.addf %24, %25 : vector<8x512xf32>
    %27 = vector.extract_strided_slice %26 {offsets = [0, 0], sizes = [8, 384], strides = [1, 1]} : vector<8x512xf32> to vector<8x384xf32>
    %cst_16 = arith.constant 5.000000e-01 : f32
    %28 = vector.broadcast %cst_16 : f32 to vector<8x384xf32>
    %29 = arith.mulf %28, %27 : vector<8x384xf32>
    %30 = math.tanh %29 : vector<8x384xf32>
    %cst_17 = arith.constant 1.000000e+00 : f32
    %31 = vector.broadcast %cst_17 : f32 to vector<8x384xf32>
    %32 = arith.addf %30, %31 : vector<8x384xf32>
    %cst_18 = arith.constant 5.000000e-01 : f32
    %33 = vector.broadcast %cst_18 : f32 to vector<8x384xf32>
    %34 = arith.mulf %33, %32 : vector<8x384xf32>
    %35 = vector.extract_strided_slice %34 {offsets = [0, 0], sizes = [8, 128], strides = [1, 1]} : vector<8x384xf32> to vector<8x128xf32>
    %36 = vector.extract_strided_slice %34 {offsets = [0, 128], sizes = [8, 128], strides = [1, 1]} : vector<8x384xf32> to vector<8x128xf32>
    %37 = vector.extract_strided_slice %34 {offsets = [0, 256], sizes = [8, 128], strides = [1, 1]} : vector<8x384xf32> to vector<8x128xf32>
    %38 = vector.extract_strided_slice %26 {offsets = [0, 384], sizes = [8, 128], strides = [1, 1]} : vector<8x512xf32> to vector<8x128xf32>
    %39 = math.tanh %38 : vector<8x128xf32>
    %40 = arith.mulf %36, %21 : vector<8x128xf32>
    %41 = arith.mulf %35, %39 : vector<8x128xf32>
    %42 = arith.addf %40, %41 : vector<8x128xf32>
    %43 = math.tanh %42 : vector<8x128xf32>
    %44 = arith.mulf %37, %43 : vector<8x128xf32>
    %c16 = arith.constant 16 : index
    %c0_19 = arith.constant 0 : index
    %45 = vector.load %arg6[%c16, %c0_19] : memref<64x512xf32, #tpu.memory_space<vmem>>, vector<8x512xf32>
    %cst_20 = arith.constant dense<0.000000e+00> : vector<8x512xf32>
    %46 = tpu.matmul %44, %7, %cst_20 {dimension_numbers = #tpu.dot_dimension_numbers<[1], [0], [0], [1], [0, 0, 1, 1], [], []>} : vector<8x128xf32>, vector<128x512xf32>, vector<8x512xf32> -> vector<8x512xf32>
    %47 = arith.addf %45, %46 : vector<8x512xf32>
    %48 = vector.extract_strided_slice %47 {offsets = [0, 0], sizes = [8, 384], strides = [1, 1]} : vector<8x512xf32> to vector<8x384xf32>
    %cst_21 = arith.constant 5.000000e-01 : f32
    %49 = vector.broadcast %cst_21 : f32 to vector<8x384xf32>
    %50 = arith.mulf %49, %48 : vector<8x384xf32>
    %51 = math.tanh %50 : vector<8x384xf32>
    %cst_22 = arith.constant 1.000000e+00 : f32
    %52 = vector.broadcast %cst_22 : f32 to vector<8x384xf32>
    %53 = arith.addf %51, %52 : vector<8x384xf32>
    %cst_23 = arith.constant 5.000000e-01 : f32
    %54 = vector.broadcast %cst_23 : f32 to vector<8x384xf32>
    %55 = arith.mulf %54, %53 : vector<8x384xf32>
    %56 = vector.extract_strided_slice %55 {offsets = [0, 0], sizes = [8, 128], strides = [1, 1]} : vector<8x384xf32> to vector<8x128xf32>
    %57 = vector.extract_strided_slice %55 {offsets = [0, 128], sizes = [8, 128], strides = [1, 1]} : vector<8x384xf32> to vector<8x128xf32>
    %58 = vector.extract_strided_slice %55 {offsets = [0, 256], sizes = [8, 128], strides = [1, 1]} : vector<8x384xf32> to vector<8x128xf32>
    %59 = vector.extract_strided_slice %47 {offsets = [0, 384], sizes = [8, 128], strides = [1, 1]} : vector<8x512xf32> to vector<8x128xf32>
    %60 = math.tanh %59 : vector<8x128xf32>
    %61 = arith.mulf %57, %42 : vector<8x128xf32>
    %62 = arith.mulf %56, %60 : vector<8x128xf32>
    %63 = arith.addf %61, %62 : vector<8x128xf32>
    %64 = math.tanh %63 : vector<8x128xf32>
    %65 = arith.mulf %58, %64 : vector<8x128xf32>
    %c24 = arith.constant 24 : index
    %c0_24 = arith.constant 0 : index
    %66 = vector.load %arg6[%c24, %c0_24] : memref<64x512xf32, #tpu.memory_space<vmem>>, vector<8x512xf32>
    %cst_25 = arith.constant dense<0.000000e+00> : vector<8x512xf32>
    %67 = tpu.matmul %65, %7, %cst_25 {dimension_numbers = #tpu.dot_dimension_numbers<[1], [0], [0], [1], [0, 0, 1, 1], [], []>} : vector<8x128xf32>, vector<128x512xf32>, vector<8x512xf32> -> vector<8x512xf32>
    %68 = arith.addf %66, %67 : vector<8x512xf32>
    %69 = vector.extract_strided_slice %68 {offsets = [0, 0], sizes = [8, 384], strides = [1, 1]} : vector<8x512xf32> to vector<8x384xf32>
    %cst_26 = arith.constant 5.000000e-01 : f32
    %70 = vector.broadcast %cst_26 : f32 to vector<8x384xf32>
    %71 = arith.mulf %70, %69 : vector<8x384xf32>
    %72 = math.tanh %71 : vector<8x384xf32>
    %cst_27 = arith.constant 1.000000e+00 : f32
    %73 = vector.broadcast %cst_27 : f32 to vector<8x384xf32>
    %74 = arith.addf %72, %73 : vector<8x384xf32>
    %cst_28 = arith.constant 5.000000e-01 : f32
    %75 = vector.broadcast %cst_28 : f32 to vector<8x384xf32>
    %76 = arith.mulf %75, %74 : vector<8x384xf32>
    %77 = vector.extract_strided_slice %76 {offsets = [0, 0], sizes = [8, 128], strides = [1, 1]} : vector<8x384xf32> to vector<8x128xf32>
    %78 = vector.extract_strided_slice %76 {offsets = [0, 128], sizes = [8, 128], strides = [1, 1]} : vector<8x384xf32> to vector<8x128xf32>
    %79 = vector.extract_strided_slice %76 {offsets = [0, 256], sizes = [8, 128], strides = [1, 1]} : vector<8x384xf32> to vector<8x128xf32>
    %80 = vector.extract_strided_slice %68 {offsets = [0, 384], sizes = [8, 128], strides = [1, 1]} : vector<8x512xf32> to vector<8x128xf32>
    %81 = math.tanh %80 : vector<8x128xf32>
    %82 = arith.mulf %78, %63 : vector<8x128xf32>
    %83 = arith.mulf %77, %81 : vector<8x128xf32>
    %84 = arith.addf %82, %83 : vector<8x128xf32>
    %85 = math.tanh %84 : vector<8x128xf32>
    %86 = arith.mulf %79, %85 : vector<8x128xf32>
    %c32 = arith.constant 32 : index
    %c0_29 = arith.constant 0 : index
    %87 = vector.load %arg6[%c32, %c0_29] : memref<64x512xf32, #tpu.memory_space<vmem>>, vector<8x512xf32>
    %cst_30 = arith.constant dense<0.000000e+00> : vector<8x512xf32>
    %88 = tpu.matmul %86, %7, %cst_30 {dimension_numbers = #tpu.dot_dimension_numbers<[1], [0], [0], [1], [0, 0, 1, 1], [], []>} : vector<8x128xf32>, vector<128x512xf32>, vector<8x512xf32> -> vector<8x512xf32>
    %89 = arith.addf %87, %88 : vector<8x512xf32>
    %90 = vector.extract_strided_slice %89 {offsets = [0, 0], sizes = [8, 384], strides = [1, 1]} : vector<8x512xf32> to vector<8x384xf32>
    %cst_31 = arith.constant 5.000000e-01 : f32
    %91 = vector.broadcast %cst_31 : f32 to vector<8x384xf32>
    %92 = arith.mulf %91, %90 : vector<8x384xf32>
    %93 = math.tanh %92 : vector<8x384xf32>
    %cst_32 = arith.constant 1.000000e+00 : f32
    %94 = vector.broadcast %cst_32 : f32 to vector<8x384xf32>
    %95 = arith.addf %93, %94 : vector<8x384xf32>
    %cst_33 = arith.constant 5.000000e-01 : f32
    %96 = vector.broadcast %cst_33 : f32 to vector<8x384xf32>
    %97 = arith.mulf %96, %95 : vector<8x384xf32>
    %98 = vector.extract_strided_slice %97 {offsets = [0, 0], sizes = [8, 128], strides = [1, 1]} : vector<8x384xf32> to vector<8x128xf32>
    %99 = vector.extract_strided_slice %97 {offsets = [0, 128], sizes = [8, 128], strides = [1, 1]} : vector<8x384xf32> to vector<8x128xf32>
    %100 = vector.extract_strided_slice %97 {offsets = [0, 256], sizes = [8, 128], strides = [1, 1]} : vector<8x384xf32> to vector<8x128xf32>
    %101 = vector.extract_strided_slice %89 {offsets = [0, 384], sizes = [8, 128], strides = [1, 1]} : vector<8x512xf32> to vector<8x128xf32>
    %102 = math.tanh %101 : vector<8x128xf32>
    %103 = arith.mulf %99, %84 : vector<8x128xf32>
    %104 = arith.mulf %98, %102 : vector<8x128xf32>
    %105 = arith.addf %103, %104 : vector<8x128xf32>
    %106 = math.tanh %105 : vector<8x128xf32>
    %107 = arith.mulf %100, %106 : vector<8x128xf32>
    %c40 = arith.constant 40 : index
    %c0_34 = arith.constant 0 : index
    %108 = vector.load %arg6[%c40, %c0_34] : memref<64x512xf32, #tpu.memory_space<vmem>>, vector<8x512xf32>
    %cst_35 = arith.constant dense<0.000000e+00> : vector<8x512xf32>
    %109 = tpu.matmul %107, %7, %cst_35 {dimension_numbers = #tpu.dot_dimension_numbers<[1], [0], [0], [1], [0, 0, 1, 1], [], []>} : vector<8x128xf32>, vector<128x512xf32>, vector<8x512xf32> -> vector<8x512xf32>
    %110 = arith.addf %108, %109 : vector<8x512xf32>
    %111 = vector.extract_strided_slice %110 {offsets = [0, 0], sizes = [8, 384], strides = [1, 1]} : vector<8x512xf32> to vector<8x384xf32>
    %cst_36 = arith.constant 5.000000e-01 : f32
    %112 = vector.broadcast %cst_36 : f32 to vector<8x384xf32>
    %113 = arith.mulf %112, %111 : vector<8x384xf32>
    %114 = math.tanh %113 : vector<8x384xf32>
    %cst_37 = arith.constant 1.000000e+00 : f32
    %115 = vector.broadcast %cst_37 : f32 to vector<8x384xf32>
    %116 = arith.addf %114, %115 : vector<8x384xf32>
    %cst_38 = arith.constant 5.000000e-01 : f32
    %117 = vector.broadcast %cst_38 : f32 to vector<8x384xf32>
    %118 = arith.mulf %117, %116 : vector<8x384xf32>
    %119 = vector.extract_strided_slice %118 {offsets = [0, 0], sizes = [8, 128], strides = [1, 1]} : vector<8x384xf32> to vector<8x128xf32>
    %120 = vector.extract_strided_slice %118 {offsets = [0, 128], sizes = [8, 128], strides = [1, 1]} : vector<8x384xf32> to vector<8x128xf32>
    %121 = vector.extract_strided_slice %118 {offsets = [0, 256], sizes = [8, 128], strides = [1, 1]} : vector<8x384xf32> to vector<8x128xf32>
    %122 = vector.extract_strided_slice %110 {offsets = [0, 384], sizes = [8, 128], strides = [1, 1]} : vector<8x512xf32> to vector<8x128xf32>
    %123 = math.tanh %122 : vector<8x128xf32>
    %124 = arith.mulf %120, %105 : vector<8x128xf32>
    %125 = arith.mulf %119, %123 : vector<8x128xf32>
    %126 = arith.addf %124, %125 : vector<8x128xf32>
    %127 = math.tanh %126 : vector<8x128xf32>
    %128 = arith.mulf %121, %127 : vector<8x128xf32>
    %c48 = arith.constant 48 : index
    %c0_39 = arith.constant 0 : index
    %129 = vector.load %arg6[%c48, %c0_39] : memref<64x512xf32, #tpu.memory_space<vmem>>, vector<8x512xf32>
    %cst_40 = arith.constant dense<0.000000e+00> : vector<8x512xf32>
    %130 = tpu.matmul %128, %7, %cst_40 {dimension_numbers = #tpu.dot_dimension_numbers<[1], [0], [0], [1], [0, 0, 1, 1], [], []>} : vector<8x128xf32>, vector<128x512xf32>, vector<8x512xf32> -> vector<8x512xf32>
    %131 = arith.addf %129, %130 : vector<8x512xf32>
    %132 = vector.extract_strided_slice %131 {offsets = [0, 0], sizes = [8, 384], strides = [1, 1]} : vector<8x512xf32> to vector<8x384xf32>
    %cst_41 = arith.constant 5.000000e-01 : f32
    %133 = vector.broadcast %cst_41 : f32 to vector<8x384xf32>
    %134 = arith.mulf %133, %132 : vector<8x384xf32>
    %135 = math.tanh %134 : vector<8x384xf32>
    %cst_42 = arith.constant 1.000000e+00 : f32
    %136 = vector.broadcast %cst_42 : f32 to vector<8x384xf32>
    %137 = arith.addf %135, %136 : vector<8x384xf32>
    %cst_43 = arith.constant 5.000000e-01 : f32
    %138 = vector.broadcast %cst_43 : f32 to vector<8x384xf32>
    %139 = arith.mulf %138, %137 : vector<8x384xf32>
    %140 = vector.extract_strided_slice %139 {offsets = [0, 0], sizes = [8, 128], strides = [1, 1]} : vector<8x384xf32> to vector<8x128xf32>
    %141 = vector.extract_strided_slice %139 {offsets = [0, 128], sizes = [8, 128], strides = [1, 1]} : vector<8x384xf32> to vector<8x128xf32>
    %142 = vector.extract_strided_slice %139 {offsets = [0, 256], sizes = [8, 128], strides = [1, 1]} : vector<8x384xf32> to vector<8x128xf32>
    %143 = vector.extract_strided_slice %131 {offsets = [0, 384], sizes = [8, 128], strides = [1, 1]} : vector<8x512xf32> to vector<8x128xf32>
    %144 = math.tanh %143 : vector<8x128xf32>
    %145 = arith.mulf %141, %126 : vector<8x128xf32>
    %146 = arith.mulf %140, %144 : vector<8x128xf32>
    %147 = arith.addf %145, %146 : vector<8x128xf32>
    %148 = math.tanh %147 : vector<8x128xf32>
    %149 = arith.mulf %142, %148 : vector<8x128xf32>
    %c56 = arith.constant 56 : index
    %c0_44 = arith.constant 0 : index
    %150 = vector.load %arg6[%c56, %c0_44] : memref<64x512xf32, #tpu.memory_space<vmem>>, vector<8x512xf32>
    %cst_45 = arith.constant dense<0.000000e+00> : vector<8x512xf32>
    %151 = tpu.matmul %149, %7, %cst_45 {dimension_numbers = #tpu.dot_dimension_numbers<[1], [0], [0], [1], [0, 0, 1, 1], [], []>} : vector<8x128xf32>, vector<128x512xf32>, vector<8x512xf32> -> vector<8x512xf32>
    %152 = arith.addf %150, %151 : vector<8x512xf32>
    %153 = vector.extract_strided_slice %152 {offsets = [0, 0], sizes = [8, 384], strides = [1, 1]} : vector<8x512xf32> to vector<8x384xf32>
    %cst_46 = arith.constant 5.000000e-01 : f32
    %154 = vector.broadcast %cst_46 : f32 to vector<8x384xf32>
    %155 = arith.mulf %154, %153 : vector<8x384xf32>
    %156 = math.tanh %155 : vector<8x384xf32>
    %cst_47 = arith.constant 1.000000e+00 : f32
    %157 = vector.broadcast %cst_47 : f32 to vector<8x384xf32>
    %158 = arith.addf %156, %157 : vector<8x384xf32>
    %cst_48 = arith.constant 5.000000e-01 : f32
    %159 = vector.broadcast %cst_48 : f32 to vector<8x384xf32>
    %160 = arith.mulf %159, %158 : vector<8x384xf32>
    %161 = vector.extract_strided_slice %160 {offsets = [0, 0], sizes = [8, 128], strides = [1, 1]} : vector<8x384xf32> to vector<8x128xf32>
    %162 = vector.extract_strided_slice %160 {offsets = [0, 128], sizes = [8, 128], strides = [1, 1]} : vector<8x384xf32> to vector<8x128xf32>
    %163 = vector.extract_strided_slice %160 {offsets = [0, 256], sizes = [8, 128], strides = [1, 1]} : vector<8x384xf32> to vector<8x128xf32>
    %164 = vector.extract_strided_slice %152 {offsets = [0, 384], sizes = [8, 128], strides = [1, 1]} : vector<8x512xf32> to vector<8x128xf32>
    %165 = math.tanh %164 : vector<8x128xf32>
    %166 = arith.mulf %162, %147 : vector<8x128xf32>
    %167 = arith.mulf %161, %165 : vector<8x128xf32>
    %168 = arith.addf %166, %167 : vector<8x128xf32>
    %169 = math.tanh %168 : vector<8x128xf32>
    %170 = arith.mulf %163, %169 : vector<8x128xf32>
    %c0_49 = arith.constant 0 : index
    %c512 = arith.constant 512 : index
    %171 = vector.load %arg3[%c0_49, %c512] : memref<1x768xf32, #tpu.memory_space<vmem>>, vector<1x128xf32>
    %c0_50 = arith.constant 0 : index
    %c640 = arith.constant 640 : index
    %172 = vector.load %arg3[%c0_50, %c640] : memref<1x768xf32, #tpu.memory_space<vmem>>, vector<1x128xf32>
    %c0_51 = arith.constant 0 : index
    %c0_52 = arith.constant 0 : index
    %c0_53 = arith.constant 0 : index
    %173 = vector.load %arg4[%c0_51, %c0_52, %c0_53] : memref<2x128x128xf32, #tpu.memory_space<vmem>>, vector<1x128x128xf32>
    %174 = vector.shape_cast %173 : vector<1x128x128xf32> to vector<128x128xf32>
    %cst_54 = arith.constant dense<0.000000e+00> : vector<8x128xf32>
    %175 = tpu.matmul %170, %174, %cst_54 {dimension_numbers = #tpu.dot_dimension_numbers<[1], [0], [0], [1], [0, 0, 1, 1], [], []>} : vector<8x128xf32>, vector<128x128xf32>, vector<8x128xf32> -> vector<8x128xf32>
    %176 = vector.broadcast %171 : vector<1x128xf32> to vector<8x128xf32>
    %177 = arith.addf %175, %176 : vector<8x128xf32>
    %cst_55 = arith.constant 0.000000e+00 : f32
    %178 = vector.broadcast %cst_55 : f32 to vector<8x128xf32>
    %179 = arith.cmpf ogt, %177, %178 : vector<8x128xf32>
    %cst_56 = arith.constant 0.00999999977 : f32
    %180 = vector.broadcast %cst_56 : f32 to vector<8x128xf32>
    %181 = arith.mulf %180, %177 : vector<8x128xf32>
    %182 = arith.select %179, %177, %181 : vector<8x128xi1>, vector<8x128xf32>
    %c1 = arith.constant 1 : index
    %c0_57 = arith.constant 0 : index
    %c0_58 = arith.constant 0 : index
    %183 = vector.load %arg4[%c1, %c0_57, %c0_58] : memref<2x128x128xf32, #tpu.memory_space<vmem>>, vector<1x128x128xf32>
    %184 = vector.shape_cast %183 : vector<1x128x128xf32> to vector<128x128xf32>
    %cst_59 = arith.constant dense<0.000000e+00> : vector<8x128xf32>
    %185 = tpu.matmul %182, %184, %cst_59 {dimension_numbers = #tpu.dot_dimension_numbers<[1], [0], [0], [1], [0, 0, 1, 1], [], []>} : vector<8x128xf32>, vector<128x128xf32>, vector<8x128xf32> -> vector<8x128xf32>
    %186 = vector.broadcast %172 : vector<1x128xf32> to vector<8x128xf32>
    %187 = arith.addf %185, %186 : vector<8x128xf32>
    %cst_60 = arith.constant 0.000000e+00 : f32
    %188 = vector.broadcast %cst_60 : f32 to vector<8x128xf32>
    %189 = arith.cmpf ogt, %187, %188 : vector<8x128xf32>
    %cst_61 = arith.constant 0.00999999977 : f32
    %190 = vector.broadcast %cst_61 : f32 to vector<8x128xf32>
    %191 = arith.mulf %190, %187 : vector<8x128xf32>
    %192 = arith.select %189, %187, %191 : vector<8x128xi1>, vector<8x128xf32>
    %193 = vector.extract_strided_slice %192 {offsets = [0, 0], sizes = [8, 4], strides = [1, 1]} : vector<8x128xf32> to vector<8x4xf32>
    %c0_62 = arith.constant 0 : index
    %c0_63 = arith.constant 0 : index
    %194 = vector.load %arg5[%c0_62, %c0_63] : memref<8x4xf32, #tpu.memory_space<vmem>>, vector<8x4xf32>
    tpu.vector_store %arg5[%c0_62, %c0_63], %193 {strides = array<i32>} : memref<8x4xf32, #tpu.memory_space<vmem>>, vector<8x4xf32>,
    return
  }
}

</mosaic_0001>

<llo_original>
// kernel: model_forward.1
$region0: #{model_forward.1}
  #allocation0 [shape = 'u32[]', space=smem, size = 0x4, offset = 0x4, fixed_abs, tag = 'smem constant byte address 0x4 - core index']
  #allocation1 [shape = 'u32[144,128]{1,0:T(1,128)}', space=vmem, size = 0x12000, scoped, tag = 'internal scratch']
  #allocation2 [shape = 'f32[64,512]{1,0:T(8,128)}', space=vmem, size = 0x20000, scoped, tag = 'scratch operand']
  %s0 = inlined_call_operand.vmem [shape: f32[64,20], index: 0, kind: input, shape index: {}]
  %s1 = inlined_call_operand.vmem [shape: f32[20,512], index: 1, kind: input, shape index: {}]
  %s2 = inlined_call_operand.hbm [shape: f32[128,512], index: 2, kind: input, shape index: {}]
  %s3 = inlined_call_operand.vmem [shape: f32[1,768], index: 3, kind: input, shape index: {}]
  %s4 = inlined_call_operand.hbm [shape: f32[2,128,128], index: 4, kind: input, shape index: {}]
  %s5 = inlined_call_operand.vmem [shape: f32[8,4], index: 5, kind: output, shape index: {}]
  %s6 = sld [smem:[#allocation0]]
  $region38: #{model_forward.1} parent=0
    _
  %s8 = ssub.s32 1, %s6
  %s9 = scalar_select 0, %s8, %s6
  $region1: #{model_forward.1} parent=0
    #allocation3 [shape = 'u8[262144]{0}', space=vmem, size = 0x40000, scoped, tag = 'input window, operand 2, single buffered']
    #allocation4 [shape = 's32[1]{0}', space=sflag, size = 0x4, scoped, tag = 'scoped memory for model_forward.1']
    #allocation5 [shape = 'u8[131072]{0}', space=vmem, size = 0x20000, scoped, tag = 'input window, operand 4, single buffered']
    #allocation6 [shape = 's32[1]{0}', space=sflag, size = 0x4, scoped, tag = 'scoped memory for model_forward.1']
    %10 = vsyncpa [#allocation4], 0
    %11 = vsyncpa [#allocation6], 0
    // Predicated region
    $region2: #{model_forward.1} parent=1 // pred_check
      _
    $region3: #{model_forward.1} parent=1 // pred_check_branch
      %13 = sbr.rel (0) target = $region5
    $region4: #{model_forward.1} parent=1 // pred_region
      _
    $region5: #{model_forward.1} parent=1 // pred_fallthru
      _
    // Predicated region
    $region6: #{model_forward.1} parent=1 // pred_check
      _
    $region7: #{model_forward.1} parent=1 // pred_check_branch
      %15 = sbr.rel (0) target = $region9
    $region8: #{model_forward.1} parent=1 // pred_region
      _
    $region9: #{model_forward.1} parent=1 // pred_fallthru
      _
    // Predicated region
    $region10: #{model_forward.1} parent=1 // pred_check
      _
    $region11: #{model_forward.1} parent=1 // pred_check_branch
      %17 = sbr.rel (0) target = $region13
    $region12: #{model_forward.1} parent=1 // pred_region
      %s19 = ssub.s32 8192, 8192
      %20 = vsyncadd [#allocation4], %s19
      %s21 = sshll.u32 [#allocation3], 4
      %s22 = int_to_ptr.vmem [resolvable:$true] %s21
      %27 = dma.hbm_to_vmem [thread:$0]  %s2, 8192, %s22, [#allocation4], 512, 512, 32
    $region13: #{model_forward.1} parent=1 // pred_fallthru
      _
    // Predicated region
    $region14: #{model_forward.1} parent=1 // pred_check
      _
    $region15: #{model_forward.1} parent=1 // pred_check_branch
      %29 = sbr.rel (0) target = $region17
    $region16: #{model_forward.1} parent=1 // pred_region
      _
    $region17: #{model_forward.1} parent=1 // pred_fallthru
      _
    // Predicated region
    $region18: #{model_forward.1} parent=1 // pred_check
      _
    $region19: #{model_forward.1} parent=1 // pred_check_branch
      %31 = sbr.rel (0) target = $region21
    $region20: #{model_forward.1} parent=1 // pred_region
      %s33 = ssub.s32 4096, 4096
      %34 = vsyncadd [#allocation6], %s33
      %s35 = sshll.u32 [#allocation5], 4
      %s36 = int_to_ptr.vmem [resolvable:$true] %s35
      %41 = dma.hbm_to_vmem [thread:$0]  %s4, 4096, %s36, [#allocation6], 128, 128, 8
    $region21: #{model_forward.1} parent=1 // pred_fallthru
      _
    // Predicated region
    $region22: #{model_forward.1} parent=1 // pred_check
      _
    $region23: #{model_forward.1} parent=1 // pred_check_branch
      %43 = sbr.rel (0) target = $region25
    $region24: #{model_forward.1} parent=1 // pred_region
      %44 = dma.done [#allocation4], 8192
    $region25: #{model_forward.1} parent=1 // pred_fallthru
      _
    // Predicated region
    $region26: #{model_forward.1} parent=1 // pred_check
      _
    $region27: #{model_forward.1} parent=1 // pred_check_branch
      %46 = sbr.rel (0) target = $region29
    $region28: #{model_forward.1} parent=1 // pred_region
      %47 = dma.done [#allocation6], 4096
    $region29: #{model_forward.1} parent=1 // pred_fallthru
      _
    %v48 = vld [vmem:[%s0] sm:$0xff]
    %v49 = vld [vmem:[%s0 + $0x8] sm:$0xff]
    %v50 = vld [vmem:[%s0 + $0x10] sm:$0xff]
    %v51 = vld [vmem:[%s0 + $0x18] sm:$0xff]
    %v52 = vld [vmem:[%s0 + $0x20] sm:$0xff]
    %v53 = vld [vmem:[%s0 + $0x28] sm:$0xff]
    %v54 = vld [vmem:[%s0 + $0x30] sm:$0xff]
    %v55 = vld [vmem:[%s0 + $0x38] sm:$0xff]
    %v56 = vld [vmem:[%s1] sm:$0xff]
    %v57 = vld [vmem:[%s1 + $0x8] sm:$0xff]
    %v58 = vld [vmem:[%s1 + $0x10] sm:$0xff]
    %v59 = vld [vmem:[%s1 + $0x18] sm:$0xff]
    %v60 = vld [vmem:[%s1 + $0x20] sm:$0xff]
    %v61 = vld [vmem:[%s1 + $0x28] sm:$0xff]
    %v62 = vld [vmem:[%s1 + $0x30] sm:$0xff]
    %v63 = vld [vmem:[%s1 + $0x38] sm:$0xff]
    %v64 = vld [vmem:[%s1 + $0x40] sm:$0xf]
    %v65 = vld [vmem:[%s1 + $0x48] sm:$0xf]
    %v66 = vld [vmem:[%s1 + $0x50] sm:$0xf]
    %v67 = vld [vmem:[%s1 + $0x58] sm:$0xf]
    %v68 = vld [vmem:[%s3] sm:$0xf]
    %v70 = vlaneseq
    %v71 = vshrl.u32 %v70, 7
    %v72 = vsub.s32 0, %v71
    %v73 = vrot.slane %v68, %v72
    %v74 = vlaneseq
    %v75 = vshrl.u32 %v74, 7
    %v76 = vsub.s32 1, %v75
    %v77 = vrot.slane %v68, %v76
    %v78 = vlaneseq
    %v79 = vshrl.u32 %v78, 7
    %v80 = vsub.s32 2, %v79
    %v81 = vrot.slane %v68, %v80
    %v82 = vlaneseq
    %v83 = vshrl.u32 %v82, 7
    %v84 = vsub.s32 3, %v83
    %v85 = vrot.slane %v68, %v84
    %vm90 = vcmask 162816
    %v92 = vsel %vm90, %v48, 0
    %v95 = vsel %vm90, %v49, 0
    %v98 = vsel %vm90, %v50, 0
    %v101 = vsel %vm90, %v51, 0
    %v104 = vsel %vm90, %v52, 0
    %v107 = vsel %vm90, %v53, 0
    %v110 = vsel %vm90, %v54, 0
    %v113 = vsel %vm90, %v55, 0
    %vm115 = vcmask 1043456
    %v117 = vsel %vm115, %v64, 0
    %v120 = vsel %vm115, %v65, 0
    %v123 = vsel %vm115, %v66, 0
    %v126 = vsel %vm115, %v67, 0
    %128 = vmatprep.subr.mxu0 %v57
    %129 = vmatpush1.msra.mxu0 %v56
    %130 = vmatprep.subr.mxu0 %v61
    %131 = vmatpush1.msra.mxu0 %v60
    %132 = vmatprep.subr.mxu0 %v120
    %133 = vmatpush1.msra.mxu0 %v117
    %134 = vmatprep.subr.mxu0 0.0
    %135 = vmatpush1.msra.mxu0 0.0
    %136 = vmatprep.subr.mxu0 0.0
    %137 = vmatpush1.msra.mxu0 0.0
    %138 = vmatprep.subr.mxu0 0.0
    %139 = vmatpush1.msra.mxu0 0.0
    %140 = vmatprep.subr.mxu0 0.0
    %141 = vmatpush1.msra.mxu0 0.0
    %142 = vmatprep.subr.mxu0 0.0
    %143 = vmatpush1.msra.mxu0 0.0
    %144 = vmatprep.subr.mxu0 0.0
    %145 = vmatpush1.msra.mxu0 0.0
    %146 = vmatprep.subr.mxu0 0.0
    %147 = vmatpush1.msra.mxu0 0.0
    %148 = vmatprep.subr.mxu0 0.0
    %149 = vmatpush1.msra.mxu0 0.0
    %150 = vmatprep.subr.mxu0 0.0
    %151 = vmatpush1.msra.mxu0 0.0
    %152 = vmatprep.subr.mxu0 0.0
    %153 = vmatpush1.msra.mxu0 0.0
    %154 = vmatprep.subr.mxu0 0.0
    %155 = vmatpush1.msra.mxu0 0.0
    %156 = vmatprep.subr.mxu0 0.0
    %157 = vmatpush1.msra.mxu0 0.0
    %158 = vmatprep.subr.mxu0 0.0
    %159 = vmatpush1.msra.mxu0 0.0
    %160 = vmatprep.subr.mxu0 0.0
    %161 = vmatpush1.msra.mxu0 0.0
    %162 = vmatprep.subr.mxu0 0.0
    %163 = vmatpush1.msra.mxu0 0.0
    %164 = vmatprep.subr.mxu0 0.0
    %165 = vmatpush1.msra.mxu0 0.0
    %166 = vmatprep.subr.mxu0 0.0
    %167 = vmatpush1.msra.mxu0 0.0
    %168 = vmatprep.subr.mxu0 0.0
    %169 = vmatpush1.msra.mxu0 0.0
    %170 = vmatprep.subr.mxu0 0.0
    %171 = vmatpush1.msra.mxu0 0.0
    %172 = vmatprep.subr.mxu0 0.0
    %173 = vmatpush1.msra.mxu0 0.0
    %174 = vmatprep.subr.mxu0 0.0
    %175 = vmatpush1.msra.mxu0 0.0
    %176 = vmatprep.subr.mxu0 0.0
    %177 = vmatpush1.msra.mxu0 0.0
    %178 = vmatprep.subr.mxu0 0.0
    %179 = vmatpush1.msra.mxu0 0.0
    %180 = vmatprep.subr.mxu0 0.0
    %181 = vmatpush1.msra.mxu0 0.0
    %182 = vmatprep.subr.mxu0 0.0
    %183 = vmatpush1.msra.mxu0 0.0
    %184 = vmatprep.subr.mxu0 0.0
    %185 = vmatpush1.msra.mxu0 0.0
    %186 = vmatprep.subr.mxu0 0.0
    %187 = vmatpush1.msra.mxu0 0.0
    %188 = vmatprep.subr.mxu0 0.0
    %189 = vmatpush1.msra.mxu0 0.0
    %190 = vmatprep.subr.mxu0 0.0
    %191 = vmatpush1.msra.mxu0 0.0
    %192 = vmatprep.mubr.f32.mxu0 0.0
    %193 = vmatmul.mubr.f32.gmra.mrb[0].mxu0 %v92
    %v194 = vpop.f32.mrb[0].mxu0
    %v195 = vadd.f32 %v73, %v194
    %v196 = vpop.f32.mrb[0].mxu0
    %v197 = vadd.f32 %v77, %v196
    %198 = vmatprep.mubr.f32.mxu0 0.0
    %199 = vmatmul.mubr.f32.gmra.mrb[0].mxu0 %v95
    %v200 = vpop.f32.mrb[0].mxu0
    %v201 = vadd.f32 %v73, %v200
    %v202 = vpop.f32.mrb[0].mxu0
    %v203 = vadd.f32 %v77, %v202
    %204 = vmatprep.mubr.f32.mxu0 0.0
    %205 = vmatmul.mubr.f32.gmra.mrb[0].mxu0 %v98
    %v206 = vpop.f32.mrb[0].mxu0
    %v207 = vadd.f32 %v73, %v206
    %v208 = vpop.f32.mrb[0].mxu0
    %v209 = vadd.f32 %v77, %v208
    %210 = vmatprep.mubr.f32.mxu0 0.0
    %211 = vmatmul.mubr.f32.gmra.mrb[0].mxu0 %v101
    %v212 = vpop.f32.mrb[0].mxu0
    %v213 = vadd.f32 %v73, %v212
    %v214 = vpop.f32.mrb[0].mxu0
    %v215 = vadd.f32 %v77, %v214
    %216 = vmatprep.mubr.f32.mxu0 0.0
    %217 = vmatmul.mubr.f32.gmra.mrb[0].mxu0 %v104
    %v218 = vpop.f32.mrb[0].mxu0
    %v219 = vadd.f32 %v73, %v218
    %v220 = vpop.f32.mrb[0].mxu0
    %v221 = vadd.f32 %v77, %v220
    %222 = vmatprep.mubr.f32.mxu0 0.0
    %223 = vmatmul.mubr.f32.gmra.mrb[0].mxu0 %v107
    %v224 = vpop.f32.mrb[0].mxu0
    %v225 = vadd.f32 %v73, %v224
    %v226 = vpop.f32.mrb[0].mxu0
    %v227 = vadd.f32 %v77, %v226
    %228 = vmatprep.mubr.f32.mxu0 0.0
    %229 = vmatmul.mubr.f32.gmra.mrb[0].mxu0 %v110
    %v230 = vpop.f32.mrb[0].mxu0
    %v231 = vadd.f32 %v73, %v230
    %v232 = vpop.f32.mrb[0].mxu0
    %v233 = vadd.f32 %v77, %v232
    %234 = vmatprep.mubr.f32.mxu0 0.0
    %235 = vmatmul.mubr.f32.gmra.mrb[0].mxu0 %v113
    %v236 = vpop.f32.mrb[0].mxu0
    %v237 = vadd.f32 %v73, %v236
    %v238 = vpop.f32.mrb[0].mxu0
    %v239 = vadd.f32 %v77, %v238
    %240 = vdwg.mxu0
    %241 = vmatprep.subr.mxu0 %v59
    %242 = vmatpush1.msra.mxu0 %v58
    %243 = vmatprep.subr.mxu0 %v63
    %244 = vmatpush1.msra.mxu0 %v62
    %245 = vmatprep.subr.mxu0 %v126
    %246 = vmatpush1.msra.mxu0 %v123
    %247 = vmatprep.subr.mxu0 0.0
    %248 = vmatpush1.msra.mxu0 0.0
    %249 = vmatprep.subr.mxu0 0.0
    %250 = vmatpush1.msra.mxu0 0.0
    %251 = vmatprep.subr.mxu0 0.0
    %252 = vmatpush1.msra.mxu0 0.0
    %253 = vmatprep.subr.mxu0 0.0
    %254 = vmatpush1.msra.mxu0 0.0
    %255 = vmatprep.subr.mxu0 0.0
    %256 = vmatpush1.msra.mxu0 0.0
    %257 = vmatprep.subr.mxu0 0.0
    %258 = vmatpush1.msra.mxu0 0.0
    %259 = vmatprep.subr.mxu0 0.0
    %260 = vmatpush1.msra.mxu0 0.0
    %261 = vmatprep.subr.mxu0 0.0
    %262 = vmatpush1.msra.mxu0 0.0
    %263 = vmatprep.subr.mxu0 0.0
    %264 = vmatpush1.msra.mxu0 0.0
    %265 = vmatprep.subr.mxu0 0.0
    %266 = vmatpush1.msra.mxu0 0.0
    %267 = vmatprep.subr.mxu0 0.0
    %268 = vmatpush1.msra.mxu0 0.0
    %269 = vmatprep.subr.mxu0 0.0
    %270 = vmatpush1.msra.mxu0 0.0
    %271 = vmatprep.subr.mxu0 0.0
    %272 = vmatpush1.msra.mxu0 0.0
    %273 = vmatprep.subr.mxu0 0.0
    %274 = vmatpush1.msra.mxu0 0.0
    %275 = vmatprep.subr.mxu0 0.0
    %276 = vmatpush1.msra.mxu0 0.0
    %277 = vmatprep.subr.mxu0 0.0
    %278 = vmatpush1.msra.mxu0 0.0
    %279 = vmatprep.subr.mxu0 0.0
    %280 = vmatpush1.msra.mxu0 0.0
    %281 = vmatprep.subr.mxu0 0.0
    %282 = vmatpush1.msra.mxu0 0.0
    %283 = vmatprep.subr.mxu0 0.0
    %284 = vmatpush1.msra.mxu0 0.0
    %285 = vmatprep.subr.mxu0 0.0
    %286 = vmatpush1.msra.mxu0 0.0
    %287 = vmatprep.subr.mxu0 0.0
    %288 = vmatpush1.msra.mxu0 0.0
    %289 = vmatprep.subr.mxu0 0.0
    %290 = vmatpush1.msra.mxu0 0.0
    %291 = vmatprep.subr.mxu0 0.0
    %292 = vmatpush1.msra.mxu0 0.0
    %293 = vmatprep.subr.mxu0 0.0
    %294 = vmatpush1.msra.mxu0 0.0
    %295 = vmatprep.subr.mxu0 0.0
    %296 = vmatpush1.msra.mxu0 0.0
    %297 = vmatprep.subr.mxu0 0.0
    %298 = vmatpush1.msra.mxu0 0.0
    %299 = vmatprep.subr.mxu0 0.0
    %300 = vmatpush1.msra.mxu0 0.0
    %301 = vmatprep.subr.mxu0 0.0
    %302 = vmatpush1.msra.mxu0 0.0
    %303 = vmatprep.subr.mxu0 0.0
    %304 = vmatpush1.msra.mxu0 0.0
    %305 = vmatprep.mubr.f32.mxu0 0.0
    %306 = vmatmul.mubr.f32.gmra.mrb[0].mxu0 %v92
    %v307 = vpop.f32.mrb[0].mxu0
    %v308 = vadd.f32 %v81, %v307
    %v309 = vpop.f32.mrb[0].mxu0
    %v310 = vadd.f32 %v85, %v309
    %311 = vmatprep.mubr.f32.mxu0 0.0
    %312 = vmatmul.mubr.f32.gmra.mrb[0].mxu0 %v95
    %v313 = vpop.f32.mrb[0].mxu0
    %v314 = vadd.f32 %v81, %v313
    %v315 = vpop.f32.mrb[0].mxu0
    %v316 = vadd.f32 %v85, %v315
    %317 = vmatprep.mubr.f32.mxu0 0.0
    %318 = vmatmul.mubr.f32.gmra.mrb[0].mxu0 %v98
    %v319 = vpop.f32.mrb[0].mxu0
    %v320 = vadd.f32 %v81, %v319
    %v321 = vpop.f32.mrb[0].mxu0
    %v322 = vadd.f32 %v85, %v321
    %323 = vmatprep.mubr.f32.mxu0 0.0
    %324 = vmatmul.mubr.f32.gmra.mrb[0].mxu0 %v101
    %v325 = vpop.f32.mrb[0].mxu0
    %v326 = vadd.f32 %v81, %v325
    %v327 = vpop.f32.mrb[0].mxu0
    %v328 = vadd.f32 %v85, %v327
    %329 = vmatprep.mubr.f32.mxu0 0.0
    %330 = vmatmul.mubr.f32.gmra.mrb[0].mxu0 %v104
    %v331 = vpop.f32.mrb[0].mxu0
    %v332 = vadd.f32 %v81, %v331
    %v333 = vpop.f32.mrb[0].mxu0
    %v334 = vadd.f32 %v85, %v333
    %335 = vmatprep.mubr.f32.mxu0 0.0
    %336 = vmatmul.mubr.f32.gmra.mrb[0].mxu0 %v107
    %v337 = vpop.f32.mrb[0].mxu0
    %v338 = vadd.f32 %v81, %v337
    %v339 = vpop.f32.mrb[0].mxu0
    %v340 = vadd.f32 %v85, %v339
    %341 = vmatprep.mubr.f32.mxu0 0.0
    %342 = vmatmul.mubr.f32.gmra.mrb[0].mxu0 %v110
    %v343 = vpop.f32.mrb[0].mxu0
    %v344 = vadd.f32 %v81, %v343
    %v345 = vpop.f32.mrb[0].mxu0
    %v346 = vadd.f32 %v85, %v345
    %347 = vmatprep.mubr.f32.mxu0 0.0
    %348 = vmatmul.mubr.f32.gmra.mrb[0].mxu0 %v113
    %v349 = vpop.f32.mrb[0].mxu0
    %v350 = vadd.f32 %v81, %v349
    %v351 = vpop.f32.mrb[0].mxu0
    %v352 = vadd.f32 %v85, %v351
    %353 = vdwg.mxu0
    %354 = vst [vmem:[#allocation2] sm:$0xff] %v195
    %355 = vst [vmem:[#allocation2 + $0x8] sm:$0xff] %v197
    %356 = vst [vmem:[#allocation2 + $0x10] sm:$0xff] %v308
    %357 = vst [vmem:[#allocation2 + $0x18] sm:$0xff] %v310
    %358 = vst [vmem:[#allocation2 + $0x20] sm:$0xff] %v201
    %359 = vst [vmem:[#allocation2 + $0x28] sm:$0xff] %v203
    %360 = vst [vmem:[#allocation2 + $0x30] sm:$0xff] %v314
    %361 = vst [vmem:[#allocation2 + $0x38] sm:$0xff] %v316
    %362 = vst [vmem:[#allocation2 + $0x40] sm:$0xff] %v207
    %363 = vst [vmem:[#allocation2 + $0x48] sm:$0xff] %v209
    %364 = vst [vmem:[#allocation2 + $0x50] sm:$0xff] %v320
    %365 = vst [vmem:[#allocation2 + $0x58] sm:$0xff] %v322
    %366 = vst [vmem:[#allocation2 + $0x60] sm:$0xff] %v213
    %367 = vst [vmem:[#allocation2 + $0x68] sm:$0xff] %v215
    %368 = vst [vmem:[#allocation2 + $0x70] sm:$0xff] %v326
    %369 = vst [vmem:[#allocation2 + $0x78] sm:$0xff] %v328
    %370 = vst [vmem:[#allocation2 + $0x80] sm:$0xff] %v219
    %371 = vst [vmem:[#allocation2 + $0x88] sm:$0xff] %v221
    %372 = vst [vmem:[#allocation2 + $0x90] sm:$0xff] %v332
    %373 = vst [vmem:[#allocation2 + $0x98] sm:$0xff] %v334
    %374 = vst [vmem:[#allocation2 + $0xa0] sm:$0xff] %v225
    %375 = vst [vmem:[#allocation2 + $0xa8] sm:$0xff] %v227
    %376 = vst [vmem:[#allocation2 + $0xb0] sm:$0xff] %v338
    %377 = vst [vmem:[#allocation2 + $0xb8] sm:$0xff] %v340
    %378 = vst [vmem:[#allocation2 + $0xc0] sm:$0xff] %v231
    %379 = vst [vmem:[#allocation2 + $0xc8] sm:$0xff] %v233
    %380 = vst [vmem:[#allocation2 + $0xd0] sm:$0xff] %v344
    %381 = vst [vmem:[#allocation2 + $0xd8] sm:$0xff] %v346
    %382 = vst [vmem:[#allocation2 + $0xe0] sm:$0xff] %v237
    %383 = vst [vmem:[#allocation2 + $0xe8] sm:$0xff] %v239
    %384 = vst [vmem:[#allocation2 + $0xf0] sm:$0xff] %v350
    %385 = vst [vmem:[#allocation2 + $0xf8] sm:$0xff] %v352
    %v386 = vld [vmem:[#allocation3] sm:$0xff]
    %v387 = vld [vmem:[#allocation3 + $0x8] sm:$0xff]
    %v388 = vld [vmem:[#allocation3 + $0x10] sm:$0xff]
    %v389 = vld [vmem:[#allocation3 + $0x18] sm:$0xff]
    %v390 = vld [vmem:[#allocation3 + $0x20] sm:$0xff]
    %v391 = vld [vmem:[#allocation3 + $0x28] sm:$0xff]
    %v392 = vld [vmem:[#allocation3 + $0x30] sm:$0xff]
    %v393 = vld [vmem:[#allocation3 + $0x38] sm:$0xff]
    %v394 = vld [vmem:[#allocation3 + $0x40] sm:$0xff]
    %v395 = vld [vmem:[#allocation3 + $0x48] sm:$0xff]
    %v396 = vld [vmem:[#allocation3 + $0x50] sm:$0xff]
    %v397 = vld [vmem:[#allocation3 + $0x58] sm:$0xff]
    %v398 = vld [vmem:[#allocation3 + $0x60] sm:$0xff]
    %v399 = vld [vmem:[#allocation3 + $0x68] sm:$0xff]
    %v400 = vld [vmem:[#allocation3 + $0x70] sm:$0xff]
    %v401 = vld [vmem:[#allocation3 + $0x78] sm:$0xff]
    %v402 = vld [vmem:[#allocation3 + $0x80] sm:$0xff]
    %v403 = vld [vmem:[#allocation3 + $0x88] sm:$0xff]
    %v404 = vld [vmem:[#allocation3 + $0x90] sm:$0xff]
    %v405 = vld [vmem:[#allocation3 + $0x98] sm:$0xff]
    %v406 = vld [vmem:[#allocation3 + $0xa0] sm:$0xff]
    %v407 = vld [vmem:[#allocation3 + $0xa8] sm:$0xff]
    %v408 = vld [vmem:[#allocation3 + $0xb0] sm:$0xff]
    %v409 = vld [vmem:[#allocation3 + $0xb8] sm:$0xff]
    %v410 = vld [vmem:[#allocation3 + $0xc0] sm:$0xff]
    %v411 = vld [vmem:[#allocation3 + $0xc8] sm:$0xff]
    %v412 = vld [vmem:[#allocation3 + $0xd0] sm:$0xff]
    %v413 = vld [vmem:[#allocation3 + $0xd8] sm:$0xff]
    %v414 = vld [vmem:[#allocation3 + $0xe0] sm:$0xff]
    %v415 = vld [vmem:[#allocation3 + $0xe8] sm:$0xff]
    %v416 = vld [vmem:[#allocation3 + $0xf0] sm:$0xff]
    %v417 = vld [vmem:[#allocation3 + $0xf8] sm:$0xff]
    %v418 = vld [vmem:[#allocation3 + $0x100] sm:$0xff]
    %v419 = vld [vmem:[#allocation3 + $0x108] sm:$0xff]
    %v420 = vld [vmem:[#allocation3 + $0x110] sm:$0xff]
    %v421 = vld [vmem:[#allocation3 + $0x118] sm:$0xff]
    %v422 = vld [vmem:[#allocation3 + $0x120] sm:$0xff]
    %v423 = vld [vmem:[#allocation3 + $0x128] sm:$0xff]
    %v424 = vld [vmem:[#allocation3 + $0x130] sm:$0xff]
    %v425 = vld [vmem:[#allocation3 + $0x138] sm:$0xff]
    %v426 = vld [vmem:[#allocation3 + $0x140] sm:$0xff]
    %v427 = vld [vmem:[#allocation3 + $0x148] sm:$0xff]
    %v428 = vld [vmem:[#allocation3 + $0x150] sm:$0xff]
    %v429 = vld [vmem:[#allocation3 + $0x158] sm:$0xff]
    %v430 = vld [vmem:[#allocation3 + $0x160] sm:$0xff]
    %v431 = vld [vmem:[#allocation3 + $0x168] sm:$0xff]
    %v432 = vld [vmem:[#allocation3 + $0x170] sm:$0xff]
    %v433 = vld [vmem:[#allocation3 + $0x178] sm:$0xff]
    %v434 = vld [vmem:[#allocation3 + $0x180] sm:$0xff]
    %v435 = vld [vmem:[#allocation3 + $0x188] sm:$0xff]
    %v436 = vld [vmem:[#allocation3 + $0x190] sm:$0xff]
    %v437 = vld [vmem:[#allocation3 + $0x198] sm:$0xff]
    %v438 = vld [vmem:[#allocation3 + $0x1a0] sm:$0xff]
    %v439 = vld [vmem:[#allocation3 + $0x1a8] sm:$0xff]
    %v440 = vld [vmem:[#allocation3 + $0x1b0] sm:$0xff]
    %v441 = vld [vmem:[#allocation3 + $0x1b8] sm:$0xff]
    %v442 = vld [vmem:[#allocation3 + $0x1c0] sm:$0xff]
    %v443 = vld [vmem:[#allocation3 + $0x1c8] sm:$0xff]
    %v444 = vld [vmem:[#allocation3 + $0x1d0] sm:$0xff]
    %v445 = vld [vmem:[#allocation3 + $0x1d8] sm:$0xff]
    %v446 = vld [vmem:[#allocation3 + $0x1e0] sm:$0xff]
    %v447 = vld [vmem:[#allocation3 + $0x1e8] sm:$0xff]
    %v448 = vld [vmem:[#allocation3 + $0x1f0] sm:$0xff]
    %v449 = vld [vmem:[#allocation3 + $0x1f8] sm:$0xff]
    %v450 = vld [vmem:[#allocation2] sm:$0xff]
    %v451 = vld [vmem:[#allocation2 + $0x10] sm:$0xff]
    %v452 = vld [vmem:[#allocation2 + $0x18] sm:$0xff]
    %v453 = vmul.f32 %v450, 0.5
    %v454 = vmul.f32 %v451, 0.5
    %v455 = vtanh.pop %v453
    %v456 = vtanh.pop %v454
    %v457 = vadd.f32 %v455, 1.0
    %v458 = vadd.f32 %v456, 1.0
    %v459 = vmul.f32 %v457, 0.5
    %v460 = vmul.f32 %v458, 0.5
    %v461 = vtanh.pop %v452
    %v462 = vmul.f32 %v459, %v461
    %v463 = vtanh.pop %v462
    %v464 = vmul.f32 %v460, %v463
    %v465 = vld [vmem:[#allocation2 + $0x20] sm:$0xff]
    %v466 = vld [vmem:[#allocation2 + $0x28] sm:$0xff]
    %v467 = vld [vmem:[#allocation2 + $0x30] sm:$0xff]
    %v468 = vld [vmem:[#allocation2 + $0x38] sm:$0xff]
    %469 = vmatprep.subr.mxu0 %v387
    %470 = vmatpush1.msra.mxu0 %v386
    %471 = vmatprep.subr.mxu0 %v391
    %472 = vmatpush1.msra.mxu0 %v390
    %473 = vmatprep.subr.mxu0 %v395
    %474 = vmatpush1.msra.mxu0 %v394
    %475 = vmatprep.subr.mxu0 %v399
    %476 = vmatpush1.msra.mxu0 %v398
    %477 = vmatprep.subr.mxu0 %v403
    %478 = vmatpush1.msra.mxu0 %v402
    %479 = vmatprep.subr.mxu0 %v407
    %480 = vmatpush1.msra.mxu0 %v406
    %481 = vmatprep.subr.mxu0 %v411
    %482 = vmatpush1.msra.mxu0 %v410
    %483 = vmatprep.subr.mxu0 %v415
    %484 = vmatpush1.msra.mxu0 %v414
    %485 = vmatprep.subr.mxu0 %v419
    %486 = vmatpush1.msra.mxu0 %v418
    %487 = vmatprep.subr.mxu0 %v423
    %488 = vmatpush1.msra.mxu0 %v422
    %489 = vmatprep.subr.mxu0 %v427
    %490 = vmatpush1.msra.mxu0 %v426
    %491 = vmatprep.subr.mxu0 %v431
    %492 = vmatpush1.msra.mxu0 %v430
    %493 = vmatprep.subr.mxu0 %v435
    %494 = vmatpush1.msra.mxu0 %v434
    %495 = vmatprep.subr.mxu0 %v439
    %496 = vmatpush1.msra.mxu0 %v438
    %497 = vmatprep.subr.mxu0 %v443
    %498 = vmatpush1.msra.mxu0 %v442
    %499 = vmatprep.subr.mxu0 %v447
    %500 = vmatpush1.msra.mxu0 %v446
    %501 = vmatprep.subr.mxu0 0.0
    %502 = vmatpush1.msra.mxu0 0.0
    %503 = vmatprep.subr.mxu0 0.0
    %504 = vmatpush1.msra.mxu0 0.0
    %505 = vmatprep.subr.mxu0 0.0
    %506 = vmatpush1.msra.mxu0 0.0
    %507 = vmatprep.subr.mxu0 0.0
    %508 = vmatpush1.msra.mxu0 0.0
    %509 = vmatprep.subr.mxu0 0.0
    %510 = vmatpush1.msra.mxu0 0.0
    %511 = vmatprep.subr.mxu0 0.0
    %512 = vmatpush1.msra.mxu0 0.0
    %513 = vmatprep.subr.mxu0 0.0
    %514 = vmatpush1.msra.mxu0 0.0
    %515 = vmatprep.subr.mxu0 0.0
    %516 = vmatpush1.msra.mxu0 0.0
    %517 = vmatprep.subr.mxu0 0.0
    %518 = vmatpush1.msra.mxu0 0.0
    %519 = vmatprep.subr.mxu0 0.0
    %520 = vmatpush1.msra.mxu0 0.0
    %521 = vmatprep.subr.mxu0 0.0
    %522 = vmatpush1.msra.mxu0 0.0
    %523 = vmatprep.subr.mxu0 0.0
    %524 = vmatpush1.msra.mxu0 0.0
    %525 = vmatprep.subr.mxu0 0.0
    %526 = vmatpush1.msra.mxu0 0.0
    %527 = vmatprep.subr.mxu0 0.0
    %528 = vmatpush1.msra.mxu0 0.0
    %529 = vmatprep.subr.mxu0 0.0
    %530 = vmatpush1.msra.mxu0 0.0
    %531 = vmatprep.subr.mxu0 0.0
    %532 = vmatpush1.msra.mxu0 0.0
    %533 = vmatprep.mubr.f32.mxu0 0.0
    %534 = vmatmul.mubr.f32.gmra.mrb[0].mxu0 %v464
    %v535 = vpop.f32.mrb[0].mxu0
    %v536 = vadd.f32 0.0, %v535
    %v537 = vpop.f32.mrb[0].mxu0
    %v538 = vadd.f32 0.0, %v537
    %539 = vdwg.mxu0
    %540 = vmatprep.subr.mxu0 %v389
    %541 = vmatpush1.msra.mxu0 %v388
    %542 = vmatprep.subr.mxu0 %v393
    %543 = vmatpush1.msra.mxu0 %v392
    %544 = vmatprep.subr.mxu0 %v397
    %545 = vmatpush1.msra.mxu0 %v396
    %546 = vmatprep.subr.mxu0 %v401
    %547 = vmatpush1.msra.mxu0 %v400
    %548 = vmatprep.subr.mxu0 %v405
    %549 = vmatpush1.msra.mxu0 %v404
    %550 = vmatprep.subr.mxu0 %v409
    %551 = vmatpush1.msra.mxu0 %v408
    %552 = vmatprep.subr.mxu0 %v413
    %553 = vmatpush1.msra.mxu0 %v412
    %554 = vmatprep.subr.mxu0 %v417
    %555 = vmatpush1.msra.mxu0 %v416
    %556 = vmatprep.subr.mxu0 %v421
    %557 = vmatpush1.msra.mxu0 %v420
    %558 = vmatprep.subr.mxu0 %v425
    %559 = vmatpush1.msra.mxu0 %v424
    %560 = vmatprep.subr.mxu0 %v429
    %561 = vmatpush1.msra.mxu0 %v428
    %562 = vmatprep.subr.mxu0 %v433
    %563 = vmatpush1.msra.mxu0 %v432
    %564 = vmatprep.subr.mxu0 %v437
    %565 = vmatpush1.msra.mxu0 %v436
    %566 = vmatprep.subr.mxu0 %v441
    %567 = vmatpush1.msra.mxu0 %v440
    %568 = vmatprep.subr.mxu0 %v445
    %569 = vmatpush1.msra.mxu0 %v444
    %570 = vmatprep.subr.mxu0 %v449
    %571 = vmatpush1.msra.mxu0 %v448
    %572 = vmatprep.subr.mxu0 0.0
    %573 = vmatpush1.msra.mxu0 0.0
    %574 = vmatprep.subr.mxu0 0.0
    %575 = vmatpush1.msra.mxu0 0.0
    %576 = vmatprep.subr.mxu0 0.0
    %577 = vmatpush1.msra.mxu0 0.0
    %578 = vmatprep.subr.mxu0 0.0
    %579 = vmatpush1.msra.mxu0 0.0
    %580 = vmatprep.subr.mxu0 0.0
    %581 = vmatpush1.msra.mxu0 0.0
    %582 = vmatprep.subr.mxu0 0.0
    %583 = vmatpush1.msra.mxu0 0.0
    %584 = vmatprep.subr.mxu0 0.0
    %585 = vmatpush1.msra.mxu0 0.0
    %586 = vmatprep.subr.mxu0 0.0
    %587 = vmatpush1.msra.mxu0 0.0
    %588 = vmatprep.subr.mxu0 0.0
    %589 = vmatpush1.msra.mxu0 0.0
    %590 = vmatprep.subr.mxu0 0.0
    %591 = vmatpush1.msra.mxu0 0.0
    %592 = vmatprep.subr.mxu0 0.0
    %593 = vmatpush1.msra.mxu0 0.0
    %594 = vmatprep.subr.mxu0 0.0
    %595 = vmatpush1.msra.mxu0 0.0
    %596 = vmatprep.subr.mxu0 0.0
    %597 = vmatpush1.msra.mxu0 0.0
    %598 = vmatprep.subr.mxu0 0.0
    %599 = vmatpush1.msra.mxu0 0.0
    %600 = vmatprep.subr.mxu0 0.0
    %601 = vmatpush1.msra.mxu0 0.0
    %602 = vmatprep.subr.mxu0 0.0
    %603 = vmatpush1.msra.mxu0 0.0
    %604 = vmatprep.mubr.f32.mxu0 0.0
    %605 = vmatmul.mubr.f32.gmra.mrb[0].mxu0 %v464
    %v606 = vpop.f32.mrb[0].mxu0
    %v607 = vadd.f32 0.0, %v606
    %v608 = vpop.f32.mrb[0].mxu0
    %v609 = vadd.f32 0.0, %v608
    %610 = vdwg.mxu0
    %v611 = vadd.f32 %v465, %v536
    %v612 = vadd.f32 %v466, %v538
    %v613 = vadd.f32 %v467, %v607
    %v614 = vadd.f32 %v468, %v609
    %v615 = vmul.f32 %v611, 0.5
    %v616 = vmul.f32 %v612, 0.5
    %v617 = vmul.f32 %v613, 0.5
    %v618 = vtanh.pop %v615
    %v619 = vtanh.pop %v616
    %v620 = vtanh.pop %v617
    %v621 = vadd.f32 %v618, 1.0
    %v622 = vadd.f32 %v619, 1.0
    %v623 = vadd.f32 %v620, 1.0
    %v624 = vmul.f32 %v621, 0.5
    %v625 = vmul.f32 %v622, 0.5
    %v626 = vmul.f32 %v623, 0.5
    %v627 = vtanh.pop %v614
    %v628 = vmul.f32 %v625, %v462
    %v629 = vmul.f32 %v624, %v627
    %v630 = vadd.f32 %v628, %v629
    %v631 = vtanh.pop %v630
    %v632 = vmul.f32 %v626, %v631
    %v633 = vld [vmem:[#allocation2 + $0x40] sm:$0xff]
    %v634 = vld [vmem:[#allocation2 + $0x48] sm:$0xff]
    %v635 = vld [vmem:[#allocation2 + $0x50] sm:$0xff]
    %v636 = vld [vmem:[#allocation2 + $0x58] sm:$0xff]
    %637 = vmatprep.subr.mxu0 %v387
    %638 = vmatpush1.msra.mxu0 %v386
    %639 = vmatprep.subr.mxu0 %v391
    %640 = vmatpush1.msra.mxu0 %v390
    %641 = vmatprep.subr.mxu0 %v395
    %642 = vmatpush1.msra.mxu0 %v394
    %643 = vmatprep.subr.mxu0 %v399
    %644 = vmatpush1.msra.mxu0 %v398
    %645 = vmatprep.subr.mxu0 %v403
    %646 = vmatpush1.msra.mxu0 %v402
    %647 = vmatprep.subr.mxu0 %v407
    %648 = vmatpush1.msra.mxu0 %v406
    %649 = vmatprep.subr.mxu0 %v411
    %650 = vmatpush1.msra.mxu0 %v410
    %651 = vmatprep.subr.mxu0 %v415
    %652 = vmatpush1.msra.mxu0 %v414
    %653 = vmatprep.subr.mxu0 %v419
    %654 = vmatpush1.msra.mxu0 %v418
    %655 = vmatprep.subr.mxu0 %v423
    %656 = vmatpush1.msra.mxu0 %v422
    %657 = vmatprep.subr.mxu0 %v427
    %658 = vmatpush1.msra.mxu0 %v426
    %659 = vmatprep.subr.mxu0 %v431
    %660 = vmatpush1.msra.mxu0 %v430
    %661 = vmatprep.subr.mxu0 %v435
    %662 = vmatpush1.msra.mxu0 %v434
    %663 = vmatprep.subr.mxu0 %v439
    %664 = vmatpush1.msra.mxu0 %v438
    %665 = vmatprep.subr.mxu0 %v443
    %666 = vmatpush1.msra.mxu0 %v442
    %667 = vmatprep.subr.mxu0 %v447
    %668 = vmatpush1.msra.mxu0 %v446
    %669 = vmatprep.subr.mxu0 0.0
    %670 = vmatpush1.msra.mxu0 0.0
    %671 = vmatprep.subr.mxu0 0.0
    %672 = vmatpush1.msra.mxu0 0.0
    %673 = vmatprep.subr.mxu0 0.0
    %674 = vmatpush1.msra.mxu0 0.0
    %675 = vmatprep.subr.mxu0 0.0
    %676 = vmatpush1.msra.mxu0 0.0
    %677 = vmatprep.subr.mxu0 0.0
    %678 = vmatpush1.msra.mxu0 0.0
    %679 = vmatprep.subr.mxu0 0.0
    %680 = vmatpush1.msra.mxu0 0.0
    %681 = vmatprep.subr.mxu0 0.0
    %682 = vmatpush1.msra.mxu0 0.0
    %683 = vmatprep.subr.mxu0 0.0
    %684 = vmatpush1.msra.mxu0 0.0
    %685 = vmatprep.subr.mxu0 0.0
    %686 = vmatpush1.msra.mxu0 0.0
    %687 = vmatprep.subr.mxu0 0.0
    %688 = vmatpush1.msra.mxu0 0.0
    %689 = vmatprep.subr.mxu0 0.0
    %690 = vmatpush1.msra.mxu0 0.0
    %691 = vmatprep.subr.mxu0 0.0
    %692 = vmatpush1.msra.mxu0 0.0
    %693 = vmatprep.subr.mxu0 0.0
    %694 = vmatpush1.msra.mxu0 0.0
    %695 = vmatprep.subr.mxu0 0.0
    %696 = vmatpush1.msra.mxu0 0.0
    %697 = vmatprep.subr.mxu0 0.0
    %698 = vmatpush1.msra.mxu0 0.0
    %699 = vmatprep.subr.mxu0 0.0
    %700 = vmatpush1.msra.mxu0 0.0
    %701 = vmatprep.mubr.f32.mxu0 0.0
    %702 = vmatmul.mubr.f32.gmra.mrb[0].mxu0 %v632
    %v703 = vpop.f32.mrb[0].mxu0
    %v704 = vadd.f32 0.0, %v703
    %v705 = vpop.f32.mrb[0].mxu0
    %v706 = vadd.f32 0.0, %v705
    %707 = vdwg.mxu0
    %708 = vmatprep.subr.mxu0 %v389
    %709 = vmatpush1.msra.mxu0 %v388
    %710 = vmatprep.subr.mxu0 %v393
    %711 = vmatpush1.msra.mxu0 %v392
    %712 = vmatprep.subr.mxu0 %v397
    %713 = vmatpush1.msra.mxu0 %v396
    %714 = vmatprep.subr.mxu0 %v401
    %715 = vmatpush1.msra.mxu0 %v400
    %716 = vmatprep.subr.mxu0 %v405
    %717 = vmatpush1.msra.mxu0 %v404
    %718 = vmatprep.subr.mxu0 %v409
    %719 = vmatpush1.msra.mxu0 %v408
    %720 = vmatprep.subr.mxu0 %v413
    %721 = vmatpush1.msra.mxu0 %v412
    %722 = vmatprep.subr.mxu0 %v417
    %723 = vmatpush1.msra.mxu0 %v416
    %724 = vmatprep.subr.mxu0 %v421
    %725 = vmatpush1.msra.mxu0 %v420
    %726 = vmatprep.subr.mxu0 %v425
    %727 = vmatpush1.msra.mxu0 %v424
    %728 = vmatprep.subr.mxu0 %v429
    %729 = vmatpush1.msra.mxu0 %v428
    %730 = vmatprep.subr.mxu0 %v433
    %731 = vmatpush1.msra.mxu0 %v432
    %732 = vmatprep.subr.mxu0 %v437
    %733 = vmatpush1.msra.mxu0 %v436
    %734 = vmatprep.subr.mxu0 %v441
    %735 = vmatpush1.msra.mxu0 %v440
    %736 = vmatprep.subr.mxu0 %v445
    %737 = vmatpush1.msra.mxu0 %v444
    %738 = vmatprep.subr.mxu0 %v449
    %739 = vmatpush1.msra.mxu0 %v448
    %740 = vmatprep.subr.mxu0 0.0
    %741 = vmatpush1.msra.mxu0 0.0
    %742 = vmatprep.subr.mxu0 0.0
    %743 = vmatpush1.msra.mxu0 0.0
    %744 = vmatprep.subr.mxu0 0.0
    %745 = vmatpush1.msra.mxu0 0.0
    %746 = vmatprep.subr.mxu0 0.0
    %747 = vmatpush1.msra.mxu0 0.0
    %748 = vmatprep.subr.mxu0 0.0
    %749 = vmatpush1.msra.mxu0 0.0
    %750 = vmatprep.subr.mxu0 0.0
    %751 = vmatpush1.msra.mxu0 0.0
    %752 = vmatprep.subr.mxu0 0.0
    %753 = vmatpush1.msra.mxu0 0.0
    %754 = vmatprep.subr.mxu0 0.0
    %755 = vmatpush1.msra.mxu0 0.0
    %756 = vmatprep.subr.mxu0 0.0
    %757 = vmatpush1.msra.mxu0 0.0
    %758 = vmatprep.subr.mxu0 0.0
    %759 = vmatpush1.msra.mxu0 0.0
    %760 = vmatprep.subr.mxu0 0.0
    %761 = vmatpush1.msra.mxu0 0.0
    %762 = vmatprep.subr.mxu0 0.0
    %763 = vmatpush1.msra.mxu0 0.0
    %764 = vmatprep.subr.mxu0 0.0
    %765 = vmatpush1.msra.mxu0 0.0
    %766 = vmatprep.subr.mxu0 0.0
    %767 = vmatpush1.msra.mxu0 0.0
    %768 = vmatprep.subr.mxu0 0.0
    %769 = vmatpush1.msra.mxu0 0.0
    %770 = vmatprep.subr.mxu0 0.0
    %771 = vmatpush1.msra.mxu0 0.0
    %772 = vmatprep.mubr.f32.mxu0 0.0
    %773 = vmatmul.mubr.f32.gmra.mrb[0].mxu0 %v632
    %v774 = vpop.f32.mrb[0].mxu0
    %v775 = vadd.f32 0.0, %v774
    %v776 = vpop.f32.mrb[0].mxu0
    %v777 = vadd.f32 0.0, %v776
    %778 = vdwg.mxu0
    %v779 = vadd.f32 %v633, %v704
    %v780 = vadd.f32 %v634, %v706
    %v781 = vadd.f32 %v635, %v775
    %v782 = vadd.f32 %v636, %v777
    %v783 = vmul.f32 %v779, 0.5
    %v784 = vmul.f32 %v780, 0.5
    %v785 = vmul.f32 %v781, 0.5
    %v786 = vtanh.pop %v783
    %v787 = vtanh.pop %v784
    %v788 = vtanh.pop %v785
    %v789 = vadd.f32 %v786, 1.0
    %v790 = vadd.f32 %v787, 1.0
    %v791 = vadd.f32 %v788, 1.0
    %v792 = vmul.f32 %v789, 0.5
    %v793 = vmul.f32 %v790, 0.5
    %v794 = vmul.f32 %v791, 0.5
    %v795 = vtanh.pop %v782
    %v796 = vmul.f32 %v793, %v630
    %v797 = vmul.f32 %v792, %v795
    %v798 = vadd.f32 %v796, %v797
    %v799 = vtanh.pop %v798
    %v800 = vmul.f32 %v794, %v799
    %v801 = vld [vmem:[#allocation2 + $0x60] sm:$0xff]
    %v802 = vld [vmem:[#allocation2 + $0x68] sm:$0xff]
    %v803 = vld [vmem:[#allocation2 + $0x70] sm:$0xff]
    %v804 = vld [vmem:[#allocation2 + $0x78] sm:$0xff]
    %805 = vmatprep.subr.mxu0 %v387
    %806 = vmatpush1.msra.mxu0 %v386
    %807 = vmatprep.subr.mxu0 %v391
    %808 = vmatpush1.msra.mxu0 %v390
    %809 = vmatprep.subr.mxu0 %v395
    %810 = vmatpush1.msra.mxu0 %v394
    %811 = vmatprep.subr.mxu0 %v399
    %812 = vmatpush1.msra.mxu0 %v398
    %813 = vmatprep.subr.mxu0 %v403
    %814 = vmatpush1.msra.mxu0 %v402
    %815 = vmatprep.subr.mxu0 %v407
    %816 = vmatpush1.msra.mxu0 %v406
    %817 = vmatprep.subr.mxu0 %v411
    %818 = vmatpush1.msra.mxu0 %v410
    %819 = vmatprep.subr.mxu0 %v415
    %820 = vmatpush1.msra.mxu0 %v414
    %821 = vmatprep.subr.mxu0 %v419
    %822 = vmatpush1.msra.mxu0 %v418
    %823 = vmatprep.subr.mxu0 %v423
    %824 = vmatpush1.msra.mxu0 %v422
    %825 = vmatprep.subr.mxu0 %v427
    %826 = vmatpush1.msra.mxu0 %v426
    %827 = vmatprep.subr.mxu0 %v431
    %828 = vmatpush1.msra.mxu0 %v430
    %829 = vmatprep.subr.mxu0 %v435
    %830 = vmatpush1.msra.mxu0 %v434
    %831 = vmatprep.subr.mxu0 %v439
    %832 = vmatpush1.msra.mxu0 %v438
    %833 = vmatprep.subr.mxu0 %v443
    %834 = vmatpush1.msra.mxu0 %v442
    %835 = vmatprep.subr.mxu0 %v447
    %836 = vmatpush1.msra.mxu0 %v446
    %837 = vmatprep.subr.mxu0 0.0
    %838 = vmatpush1.msra.mxu0 0.0
    %839 = vmatprep.subr.mxu0 0.0
    %840 = vmatpush1.msra.mxu0 0.0
    %841 = vmatprep.subr.mxu0 0.0
    %842 = vmatpush1.msra.mxu0 0.0
    %843 = vmatprep.subr.mxu0 0.0
    %844 = vmatpush1.msra.mxu0 0.0
    %845 = vmatprep.subr.mxu0 0.0
    %846 = vmatpush1.msra.mxu0 0.0
    %847 = vmatprep.subr.mxu0 0.0
    %848 = vmatpush1.msra.mxu0 0.0
    %849 = vmatprep.subr.mxu0 0.0
    %850 = vmatpush1.msra.mxu0 0.0
    %851 = vmatprep.subr.mxu0 0.0
    %852 = vmatpush1.msra.mxu0 0.0
    %853 = vmatprep.subr.mxu0 0.0
    %854 = vmatpush1.msra.mxu0 0.0
    %855 = vmatprep.subr.mxu0 0.0
    %856 = vmatpush1.msra.mxu0 0.0
    %857 = vmatprep.subr.mxu0 0.0
    %858 = vmatpush1.msra.mxu0 0.0
    %859 = vmatprep.subr.mxu0 0.0
    %860 = vmatpush1.msra.mxu0 0.0
    %861 = vmatprep.subr.mxu0 0.0
    %862 = vmatpush1.msra.mxu0 0.0
    %863 = vmatprep.subr.mxu0 0.0
    %864 = vmatpush1.msra.mxu0 0.0
    %865 = vmatprep.subr.mxu0 0.0
    %866 = vmatpush1.msra.mxu0 0.0
    %867 = vmatprep.subr.mxu0 0.0
    %868 = vmatpush1.msra.mxu0 0.0
    %869 = vmatprep.mubr.f32.mxu0 0.0
    %870 = vmatmul.mubr.f32.gmra.mrb[0].mxu0 %v800
    %v871 = vpop.f32.mrb[0].mxu0
    %v872 = vadd.f32 0.0, %v871
    %v873 = vpop.f32.mrb[0].mxu0
    %v874 = vadd.f32 0.0, %v873
    %875 = vdwg.mxu0
    %876 = vmatprep.subr.mxu0 %v389
    %877 = vmatpush1.msra.mxu0 %v388
    %878 = vmatprep.subr.mxu0 %v393
    %879 = vmatpush1.msra.mxu0 %v392
    %880 = vmatprep.subr.mxu0 %v397
    %881 = vmatpush1.msra.mxu0 %v396
    %882 = vmatprep.subr.mxu0 %v401
    %883 = vmatpush1.msra.mxu0 %v400
    %884 = vmatprep.subr.mxu0 %v405
    %885 = vmatpush1.msra.mxu0 %v404
    %886 = vmatprep.subr.mxu0 %v409
    %887 = vmatpush1.msra.mxu0 %v408
    %888 = vmatprep.subr.mxu0 %v413
    %889 = vmatpush1.msra.mxu0 %v412
    %890 = vmatprep.subr.mxu0 %v417
    %891 = vmatpush1.msra.mxu0 %v416
    %892 = vmatprep.subr.mxu0 %v421
    %893 = vmatpush1.msra.mxu0 %v420
    %894 = vmatprep.subr.mxu0 %v425
    %895 = vmatpush1.msra.mxu0 %v424
    %896 = vmatprep.subr.mxu0 %v429
    %897 = vmatpush1.msra.mxu0 %v428
    %898 = vmatprep.subr.mxu0 %v433
    %899 = vmatpush1.msra.mxu0 %v432
    %900 = vmatprep.subr.mxu0 %v437
    %901 = vmatpush1.msra.mxu0 %v436
    %902 = vmatprep.subr.mxu0 %v441
    %903 = vmatpush1.msra.mxu0 %v440
    %904 = vmatprep.subr.mxu0 %v445
    %905 = vmatpush1.msra.mxu0 %v444
    %906 = vmatprep.subr.mxu0 %v449
    %907 = vmatpush1.msra.mxu0 %v448
    %908 = vmatprep.subr.mxu0 0.0
    %909 = vmatpush1.msra.mxu0 0.0
    %910 = vmatprep.subr.mxu0 0.0
    %911 = vmatpush1.msra.mxu0 0.0
    %912 = vmatprep.subr.mxu0 0.0
    %913 = vmatpush1.msra.mxu0 0.0
    %914 = vmatprep.subr.mxu0 0.0
    %915 = vmatpush1.msra.mxu0 0.0
    %916 = vmatprep.subr.mxu0 0.0
    %917 = vmatpush1.msra.mxu0 0.0
    %918 = vmatprep.subr.mxu0 0.0
    %919 = vmatpush1.msra.mxu0 0.0
    %920 = vmatprep.subr.mxu0 0.0
    %921 = vmatpush1.msra.mxu0 0.0
    %922 = vmatprep.subr.mxu0 0.0
    %923 = vmatpush1.msra.mxu0 0.0
    %924 = vmatprep.subr.mxu0 0.0
    %925 = vmatpush1.msra.mxu0 0.0
    %926 = vmatprep.subr.mxu0 0.0
    %927 = vmatpush1.msra.mxu0 0.0
    %928 = vmatprep.subr.mxu0 0.0
    %929 = vmatpush1.msra.mxu0 0.0
    %930 = vmatprep.subr.mxu0 0.0
    %931 = vmatpush1.msra.mxu0 0.0
    %932 = vmatprep.subr.mxu0 0.0
    %933 = vmatpush1.msra.mxu0 0.0
    %934 = vmatprep.subr.mxu0 0.0
    %935 = vmatpush1.msra.mxu0 0.0
    %936 = vmatprep.subr.mxu0 0.0
    %937 = vmatpush1.msra.mxu0 0.0
    %938 = vmatprep.subr.mxu0 0.0
    %939 = vmatpush1.msra.mxu0 0.0
    %940 = vmatprep.mubr.f32.mxu0 0.0
    %941 = vmatmul.mubr.f32.gmra.mrb[0].mxu0 %v800
    %v942 = vpop.f32.mrb[0].mxu0
    %v943 = vadd.f32 0.0, %v942
    %v944 = vpop.f32.mrb[0].mxu0
    %v945 = vadd.f32 0.0, %v944
    %946 = vdwg.mxu0
    %v947 = vadd.f32 %v801, %v872
    %v948 = vadd.f32 %v802, %v874
    %v949 = vadd.f32 %v803, %v943
    %v950 = vadd.f32 %v804, %v945
    %v951 = vmul.f32 %v947, 0.5
    %v952 = vmul.f32 %v948, 0.5
    %v953 = vmul.f32 %v949, 0.5
    %v954 = vtanh.pop %v951
    %v955 = vtanh.pop %v952
    %v956 = vtanh.pop %v953
    %v957 = vadd.f32 %v954, 1.0
    %v958 = vadd.f32 %v955, 1.0
    %v959 = vadd.f32 %v956, 1.0
    %v960 = vmul.f32 %v957, 0.5
    %v961 = vmul.f32 %v958, 0.5
    %v962 = vmul.f32 %v959, 0.5
    %v963 = vtanh.pop %v950
    %v964 = vmul.f32 %v961, %v798
    %v965 = vmul.f32 %v960, %v963
    %v966 = vadd.f32 %v964, %v965
    %v967 = vtanh.pop %v966
    %v968 = vmul.f32 %v962, %v967
    %v969 = vld [vmem:[#allocation2 + $0x80] sm:$0xff]
    %v970 = vld [vmem:[#allocation2 + $0x88] sm:$0xff]
    %v971 = vld [vmem:[#allocation2 + $0x90] sm:$0xff]
    %v972 = vld [vmem:[#allocation2 + $0x98] sm:$0xff]
    %973 = vmatprep.subr.mxu0 %v387
    %974 = vmatpush1.msra.mxu0 %v386
    %975 = vmatprep.subr.mxu0 %v391
    %976 = vmatpush1.msra.mxu0 %v390
    %977 = vmatprep.subr.mxu0 %v395
    %978 = vmatpush1.msra.mxu0 %v394
    %979 = vmatprep.subr.mxu0 %v399
    %980 = vmatpush1.msra.mxu0 %v398
    %981 = vmatprep.subr.mxu0 %v403
    %982 = vmatpush1.msra.mxu0 %v402
    %983 = vmatprep.subr.mxu0 %v407
    %984 = vmatpush1.msra.mxu0 %v406
    %985 = vmatprep.subr.mxu0 %v411
    %986 = vmatpush1.msra.mxu0 %v410
    %987 = vmatprep.subr.mxu0 %v415
    %988 = vmatpush1.msra.mxu0 %v414
    %989 = vmatprep.subr.mxu0 %v419
    %990 = vmatpush1.msra.mxu0 %v418
    %991 = vmatprep.subr.mxu0 %v423
    %992 = vmatpush1.msra.mxu0 %v422
    %993 = vmatprep.subr.mxu0 %v427
    %994 = vmatpush1.msra.mxu0 %v426
    %995 = vmatprep.subr.mxu0 %v431
    %996 = vmatpush1.msra.mxu0 %v430
    %997 = vmatprep.subr.mxu0 %v435
    %998 = vmatpush1.msra.mxu0 %v434
    %999 = vmatprep.subr.mxu0 %v439
    %1000 = vmatpush1.msra.mxu0 %v438
    %1001 = vmatprep.subr.mxu0 %v443
    %1002 = vmatpush1.msra.mxu0 %v442
    %1003 = vmatprep.subr.mxu0 %v447
    %1004 = vmatpush1.msra.mxu0 %v446
    %1005 = vmatprep.subr.mxu0 0.0
    %1006 = vmatpush1.msra.mxu0 0.0
    %1007 = vmatprep.subr.mxu0 0.0
    %1008 = vmatpush1.msra.mxu0 0.0
    %1009 = vmatprep.subr.mxu0 0.0
    %1010 = vmatpush1.msra.mxu0 0.0
    %1011 = vmatprep.subr.mxu0 0.0
    %1012 = vmatpush1.msra.mxu0 0.0
    %1013 = vmatprep.subr.mxu0 0.0
    %1014 = vmatpush1.msra.mxu0 0.0
    %1015 = vmatprep.subr.mxu0 0.0
    %1016 = vmatpush1.msra.mxu0 0.0
    %1017 = vmatprep.subr.mxu0 0.0
    %1018 = vmatpush1.msra.mxu0 0.0
    %1019 = vmatprep.subr.mxu0 0.0
    %1020 = vmatpush1.msra.mxu0 0.0
    %1021 = vmatprep.subr.mxu0 0.0
    %1022 = vmatpush1.msra.mxu0 0.0
    %1023 = vmatprep.subr.mxu0 0.0
    %1024 = vmatpush1.msra.mxu0 0.0
    %1025 = vmatprep.subr.mxu0 0.0
    %1026 = vmatpush1.msra.mxu0 0.0
    %1027 = vmatprep.subr.mxu0 0.0
    %1028 = vmatpush1.msra.mxu0 0.0
    %1029 = vmatprep.subr.mxu0 0.0
    %1030 = vmatpush1.msra.mxu0 0.0
    %1031 = vmatprep.subr.mxu0 0.0
    %1032 = vmatpush1.msra.mxu0 0.0
    %1033 = vmatprep.subr.mxu0 0.0
    %1034 = vmatpush1.msra.mxu0 0.0
    %1035 = vmatprep.subr.mxu0 0.0
    %1036 = vmatpush1.msra.mxu0 0.0
    %1037 = vmatprep.mubr.f32.mxu0 0.0
    %1038 = vmatmul.mubr.f32.gmra.mrb[0].mxu0 %v968
    %v1039 = vpop.f32.mrb[0].mxu0
    %v1040 = vadd.f32 0.0, %v1039
    %v1041 = vpop.f32.mrb[0].mxu0
    %v1042 = vadd.f32 0.0, %v1041
    %1043 = vdwg.mxu0
    %1044 = vmatprep.subr.mxu0 %v389
    %1045 = vmatpush1.msra.mxu0 %v388
    %1046 = vmatprep.subr.mxu0 %v393
    %1047 = vmatpush1.msra.mxu0 %v392
    %1048 = vmatprep.subr.mxu0 %v397
    %1049 = vmatpush1.msra.mxu0 %v396
    %1050 = vmatprep.subr.mxu0 %v401
    %1051 = vmatpush1.msra.mxu0 %v400
    %1052 = vmatprep.subr.mxu0 %v405
    %1053 = vmatpush1.msra.mxu0 %v404
    %1054 = vmatprep.subr.mxu0 %v409
    %1055 = vmatpush1.msra.mxu0 %v408
    %1056 = vmatprep.subr.mxu0 %v413
    %1057 = vmatpush1.msra.mxu0 %v412
    %1058 = vmatprep.subr.mxu0 %v417
    %1059 = vmatpush1.msra.mxu0 %v416
    %1060 = vmatprep.subr.mxu0 %v421
    %1061 = vmatpush1.msra.mxu0 %v420
    %1062 = vmatprep.subr.mxu0 %v425
    %1063 = vmatpush1.msra.mxu0 %v424
    %1064 = vmatprep.subr.mxu0 %v429
    %1065 = vmatpush1.msra.mxu0 %v428
    %1066 = vmatprep.subr.mxu0 %v433
    %1067 = vmatpush1.msra.mxu0 %v432
    %1068 = vmatprep.subr.mxu0 %v437
    %1069 = vmatpush1.msra.mxu0 %v436
    %1070 = vmatprep.subr.mxu0 %v441
    %1071 = vmatpush1.msra.mxu0 %v440
    %1072 = vmatprep.subr.mxu0 %v445
    %1073 = vmatpush1.msra.mxu0 %v444
    %1074 = vmatprep.subr.mxu0 %v449
    %1075 = vmatpush1.msra.mxu0 %v448
    %1076 = vmatprep.subr.mxu0 0.0
    %1077 = vmatpush1.msra.mxu0 0.0
    %1078 = vmatprep.subr.mxu0 0.0
    %1079 = vmatpush1.msra.mxu0 0.0
    %1080 = vmatprep.subr.mxu0 0.0
    %1081 = vmatpush1.msra.mxu0 0.0
    %1082 = vmatprep.subr.mxu0 0.0
    %1083 = vmatpush1.msra.mxu0 0.0
    %1084 = vmatprep.subr.mxu0 0.0
    %1085 = vmatpush1.msra.mxu0 0.0
    %1086 = vmatprep.subr.mxu0 0.0
    %1087 = vmatpush1.msra.mxu0 0.0
    %1088 = vmatprep.subr.mxu0 0.0
    %1089 = vmatpush1.msra.mxu0 0.0
    %1090 = vmatprep.subr.mxu0 0.0
    %1091 = vmatpush1.msra.mxu0 0.0
    %1092 = vmatprep.subr.mxu0 0.0
    %1093 = vmatpush1.msra.mxu0 0.0
    %1094 = vmatprep.subr.mxu0 0.0
    %1095 = vmatpush1.msra.mxu0 0.0
    %1096 = vmatprep.subr.mxu0 0.0
    %1097 = vmatpush1.msra.mxu0 0.0
    %1098 = vmatprep.subr.mxu0 0.0
    %1099 = vmatpush1.msra.mxu0 0.0
    %1100 = vmatprep.subr.mxu0 0.0
    %1101 = vmatpush1.msra.mxu0 0.0
    %1102 = vmatprep.subr.mxu0 0.0
    %1103 = vmatpush1.msra.mxu0 0.0
    %1104 = vmatprep.subr.mxu0 0.0
    %1105 = vmatpush1.msra.mxu0 0.0
    %1106 = vmatprep.subr.mxu0 0.0
    %1107 = vmatpush1.msra.mxu0 0.0
    %1108 = vmatprep.mubr.f32.mxu0 0.0
    %1109 = vmatmul.mubr.f32.gmra.mrb[0].mxu0 %v968
    %v1110 = vpop.f32.mrb[0].mxu0
    %v1111 = vadd.f32 0.0, %v1110
    %v1112 = vpop.f32.mrb[0].mxu0
    %v1113 = vadd.f32 0.0, %v1112
    %1114 = vdwg.mxu0
    %v1115 = vadd.f32 %v969, %v1040
    %v1116 = vadd.f32 %v970, %v1042
    %v1117 = vadd.f32 %v971, %v1111
    %v1118 = vadd.f32 %v972, %v1113
    %v1119 = vmul.f32 %v1115, 0.5
    %v1120 = vmul.f32 %v1116, 0.5
    %v1121 = vmul.f32 %v1117, 0.5
    %v1122 = vtanh.pop %v1119
    %v1123 = vtanh.pop %v1120
    %v1124 = vtanh.pop %v1121
    %v1125 = vadd.f32 %v1122, 1.0
    %v1126 = vadd.f32 %v1123, 1.0
    %v1127 = vadd.f32 %v1124, 1.0
    %v1128 = vmul.f32 %v1125, 0.5
    %v1129 = vmul.f32 %v1126, 0.5
    %v1130 = vmul.f32 %v1127, 0.5
    %v1131 = vtanh.pop %v1118
    %v1132 = vmul.f32 %v1129, %v966
    %v1133 = vmul.f32 %v1128, %v1131
    %v1134 = vadd.f32 %v1132, %v1133
    %v1135 = vtanh.pop %v1134
    %v1136 = vmul.f32 %v1130, %v1135
    %v1137 = vld [vmem:[#allocation2 + $0xa0] sm:$0xff]
    %v1138 = vld [vmem:[#allocation2 + $0xa8] sm:$0xff]
    %v1139 = vld [vmem:[#allocation2 + $0xb0] sm:$0xff]
    %v1140 = vld [vmem:[#allocation2 + $0xb8] sm:$0xff]
    %1141 = vmatprep.subr.mxu0 %v387
    %1142 = vmatpush1.msra.mxu0 %v386
    %1143 = vmatprep.subr.mxu0 %v391
    %1144 = vmatpush1.msra.mxu0 %v390
    %1145 = vmatprep.subr.mxu0 %v395
    %1146 = vmatpush1.msra.mxu0 %v394
    %1147 = vmatprep.subr.mxu0 %v399
    %1148 = vmatpush1.msra.mxu0 %v398
    %1149 = vmatprep.subr.mxu0 %v403
    %1150 = vmatpush1.msra.mxu0 %v402
    %1151 = vmatprep.subr.mxu0 %v407
    %1152 = vmatpush1.msra.mxu0 %v406
    %1153 = vmatprep.subr.mxu0 %v411
    %1154 = vmatpush1.msra.mxu0 %v410
    %1155 = vmatprep.subr.mxu0 %v415
    %1156 = vmatpush1.msra.mxu0 %v414
    %1157 = vmatprep.subr.mxu0 %v419
    %1158 = vmatpush1.msra.mxu0 %v418
    %1159 = vmatprep.subr.mxu0 %v423
    %1160 = vmatpush1.msra.mxu0 %v422
    %1161 = vmatprep.subr.mxu0 %v427
    %1162 = vmatpush1.msra.mxu0 %v426
    %1163 = vmatprep.subr.mxu0 %v431
    %1164 = vmatpush1.msra.mxu0 %v430
    %1165 = vmatprep.subr.mxu0 %v435
    %1166 = vmatpush1.msra.mxu0 %v434
    %1167 = vmatprep.subr.mxu0 %v439
    %1168 = vmatpush1.msra.mxu0 %v438
    %1169 = vmatprep.subr.mxu0 %v443
    %1170 = vmatpush1.msra.mxu0 %v442
    %1171 = vmatprep.subr.mxu0 %v447
    %1172 = vmatpush1.msra.mxu0 %v446
    %1173 = vmatprep.subr.mxu0 0.0
    %1174 = vmatpush1.msra.mxu0 0.0
    %1175 = vmatprep.subr.mxu0 0.0
    %1176 = vmatpush1.msra.mxu0 0.0
    %1177 = vmatprep.subr.mxu0 0.0
    %1178 = vmatpush1.msra.mxu0 0.0
    %1179 = vmatprep.subr.mxu0 0.0
    %1180 = vmatpush1.msra.mxu0 0.0
    %1181 = vmatprep.subr.mxu0 0.0
    %1182 = vmatpush1.msra.mxu0 0.0
    %1183 = vmatprep.subr.mxu0 0.0
    %1184 = vmatpush1.msra.mxu0 0.0
    %1185 = vmatprep.subr.mxu0 0.0
    %1186 = vmatpush1.msra.mxu0 0.0
    %1187 = vmatprep.subr.mxu0 0.0
    %1188 = vmatpush1.msra.mxu0 0.0
    %1189 = vmatprep.subr.mxu0 0.0
    %1190 = vmatpush1.msra.mxu0 0.0
    %1191 = vmatprep.subr.mxu0 0.0
    %1192 = vmatpush1.msra.mxu0 0.0
    %1193 = vmatprep.subr.mxu0 0.0
    %1194 = vmatpush1.msra.mxu0 0.0
    %1195 = vmatprep.subr.mxu0 0.0
    %1196 = vmatpush1.msra.mxu0 0.0
    %1197 = vmatprep.subr.mxu0 0.0
    %1198 = vmatpush1.msra.mxu0 0.0
    %1199 = vmatprep.subr.mxu0 0.0
    %1200 = vmatpush1.msra.mxu0 0.0
    %1201 = vmatprep.subr.mxu0 0.0
    %1202 = vmatpush1.msra.mxu0 0.0
    %1203 = vmatprep.subr.mxu0 0.0
    %1204 = vmatpush1.msra.mxu0 0.0
    %1205 = vmatprep.mubr.f32.mxu0 0.0
    %1206 = vmatmul.mubr.f32.gmra.mrb[0].mxu0 %v1136
    %v1207 = vpop.f32.mrb[0].mxu0
    %v1208 = vadd.f32 0.0, %v1207
    %v1209 = vpop.f32.mrb[0].mxu0
    %v1210 = vadd.f32 0.0, %v1209
    %1211 = vdwg.mxu0
    %1212 = vmatprep.subr.mxu0 %v389
    %1213 = vmatpush1.msra.mxu0 %v388
    %1214 = vmatprep.subr.mxu0 %v393
    %1215 = vmatpush1.msra.mxu0 %v392
    %1216 = vmatprep.subr.mxu0 %v397
    %1217 = vmatpush1.msra.mxu0 %v396
    %1218 = vmatprep.subr.mxu0 %v401
    %1219 = vmatpush1.msra.mxu0 %v400
    %1220 = vmatprep.subr.mxu0 %v405
    %1221 = vmatpush1.msra.mxu0 %v404
    %1222 = vmatprep.subr.mxu0 %v409
    %1223 = vmatpush1.msra.mxu0 %v408
    %1224 = vmatprep.subr.mxu0 %v413
    %1225 = vmatpush1.msra.mxu0 %v412
    %1226 = vmatprep.subr.mxu0 %v417
    %1227 = vmatpush1.msra.mxu0 %v416
    %1228 = vmatprep.subr.mxu0 %v421
    %1229 = vmatpush1.msra.mxu0 %v420
    %1230 = vmatprep.subr.mxu0 %v425
    %1231 = vmatpush1.msra.mxu0 %v424
    %1232 = vmatprep.subr.mxu0 %v429
    %1233 = vmatpush1.msra.mxu0 %v428
    %1234 = vmatprep.subr.mxu0 %v433
    %1235 = vmatpush1.msra.mxu0 %v432
    %1236 = vmatprep.subr.mxu0 %v437
    %1237 = vmatpush1.msra.mxu0 %v436
    %1238 = vmatprep.subr.mxu0 %v441
    %1239 = vmatpush1.msra.mxu0 %v440
    %1240 = vmatprep.subr.mxu0 %v445
    %1241 = vmatpush1.msra.mxu0 %v444
    %1242 = vmatprep.subr.mxu0 %v449
    %1243 = vmatpush1.msra.mxu0 %v448
    %1244 = vmatprep.subr.mxu0 0.0
    %1245 = vmatpush1.msra.mxu0 0.0
    %1246 = vmatprep.subr.mxu0 0.0
    %1247 = vmatpush1.msra.mxu0 0.0
    %1248 = vmatprep.subr.mxu0 0.0
    %1249 = vmatpush1.msra.mxu0 0.0
    %1250 = vmatprep.subr.mxu0 0.0
    %1251 = vmatpush1.msra.mxu0 0.0
    %1252 = vmatprep.subr.mxu0 0.0
    %1253 = vmatpush1.msra.mxu0 0.0
    %1254 = vmatprep.subr.mxu0 0.0
    %1255 = vmatpush1.msra.mxu0 0.0
    %1256 = vmatprep.subr.mxu0 0.0
    %1257 = vmatpush1.msra.mxu0 0.0
    %1258 = vmatprep.subr.mxu0 0.0
    %1259 = vmatpush1.msra.mxu0 0.0
    %1260 = vmatprep.subr.mxu0 0.0
    %1261 = vmatpush1.msra.mxu0 0.0
    %1262 = vmatprep.subr.mxu0 0.0
    %1263 = vmatpush1.msra.mxu0 0.0
    %1264 = vmatprep.subr.mxu0 0.0
    %1265 = vmatpush1.msra.mxu0 0.0
    %1266 = vmatprep.subr.mxu0 0.0
    %1267 = vmatpush1.msra.mxu0 0.0
    %1268 = vmatprep.subr.mxu0 0.0
    %1269 = vmatpush1.msra.mxu0 0.0
    %1270 = vmatprep.subr.mxu0 0.0
    %1271 = vmatpush1.msra.mxu0 0.0
    %1272 = vmatprep.subr.mxu0 0.0
    %1273 = vmatpush1.msra.mxu0 0.0
    %1274 = vmatprep.subr.mxu0 0.0
    %1275 = vmatpush1.msra.mxu0 0.0
    %1276 = vmatprep.mubr.f32.mxu0 0.0
    %1277 = vmatmul.mubr.f32.gmra.mrb[0].mxu0 %v1136
    %v1278 = vpop.f32.mrb[0].mxu0
    %v1279 = vadd.f32 0.0, %v1278
    %v1280 = vpop.f32.mrb[0].mxu0
    %v1281 = vadd.f32 0.0, %v1280
    %1282 = vdwg.mxu0
    %v1283 = vadd.f32 %v1137, %v1208
    %v1284 = vadd.f32 %v1138, %v1210
    %v1285 = vadd.f32 %v1139, %v1279
    %v1286 = vadd.f32 %v1140, %v1281
    %v1287 = vmul.f32 %v1283, 0.5
    %v1288 = vmul.f32 %v1284, 0.5
    %v1289 = vmul.f32 %v1285, 0.5
    %v1290 = vtanh.pop %v1287
    %v1291 = vtanh.pop %v1288
    %v1292 = vtanh.pop %v1289
    %v1293 = vadd.f32 %v1290, 1.0
    %v1294 = vadd.f32 %v1291, 1.0
    %v1295 = vadd.f32 %v1292, 1.0
    %v1296 = vmul.f32 %v1293, 0.5
    %v1297 = vmul.f32 %v1294, 0.5
    %v1298 = vmul.f32 %v1295, 0.5
    %v1299 = vtanh.pop %v1286
    %v1300 = vmul.f32 %v1297, %v1134
    %v1301 = vmul.f32 %v1296, %v1299
    %v1302 = vadd.f32 %v1300, %v1301
    %v1303 = vtanh.pop %v1302
    %v1304 = vmul.f32 %v1298, %v1303
    %v1305 = vld [vmem:[#allocation2 + $0xc0] sm:$0xff]
    %v1306 = vld [vmem:[#allocation2 + $0xc8] sm:$0xff]
    %v1307 = vld [vmem:[#allocation2 + $0xd0] sm:$0xff]
    %v1308 = vld [vmem:[#allocation2 + $0xd8] sm:$0xff]
    %1309 = vmatprep.subr.mxu0 %v387
    %1310 = vmatpush1.msra.mxu0 %v386
    %1311 = vmatprep.subr.mxu0 %v391
    %1312 = vmatpush1.msra.mxu0 %v390
    %1313 = vmatprep.subr.mxu0 %v395
    %1314 = vmatpush1.msra.mxu0 %v394
    %1315 = vmatprep.subr.mxu0 %v399
    %1316 = vmatpush1.msra.mxu0 %v398
    %1317 = vmatprep.subr.mxu0 %v403
    %1318 = vmatpush1.msra.mxu0 %v402
    %1319 = vmatprep.subr.mxu0 %v407
    %1320 = vmatpush1.msra.mxu0 %v406
    %1321 = vmatprep.subr.mxu0 %v411
    %1322 = vmatpush1.msra.mxu0 %v410
    %1323 = vmatprep.subr.mxu0 %v415
    %1324 = vmatpush1.msra.mxu0 %v414
    %1325 = vmatprep.subr.mxu0 %v419
    %1326 = vmatpush1.msra.mxu0 %v418
    %1327 = vmatprep.subr.mxu0 %v423
    %1328 = vmatpush1.msra.mxu0 %v422
    %1329 = vmatprep.subr.mxu0 %v427
    %1330 = vmatpush1.msra.mxu0 %v426
    %1331 = vmatprep.subr.mxu0 %v431
    %1332 = vmatpush1.msra.mxu0 %v430
    %1333 = vmatprep.subr.mxu0 %v435
    %1334 = vmatpush1.msra.mxu0 %v434
    %1335 = vmatprep.subr.mxu0 %v439
    %1336 = vmatpush1.msra.mxu0 %v438
    %1337 = vmatprep.subr.mxu0 %v443
    %1338 = vmatpush1.msra.mxu0 %v442
    %1339 = vmatprep.subr.mxu0 %v447
    %1340 = vmatpush1.msra.mxu0 %v446
    %1341 = vmatprep.subr.mxu0 0.0
    %1342 = vmatpush1.msra.mxu0 0.0
    %1343 = vmatprep.subr.mxu0 0.0
    %1344 = vmatpush1.msra.mxu0 0.0
    %1345 = vmatprep.subr.mxu0 0.0
    %1346 = vmatpush1.msra.mxu0 0.0
    %1347 = vmatprep.subr.mxu0 0.0
    %1348 = vmatpush1.msra.mxu0 0.0
    %1349 = vmatprep.subr.mxu0 0.0
    %1350 = vmatpush1.msra.mxu0 0.0
    %1351 = vmatprep.subr.mxu0 0.0
    %1352 = vmatpush1.msra.mxu0 0.0
    %1353 = vmatprep.subr.mxu0 0.0
    %1354 = vmatpush1.msra.mxu0 0.0
    %1355 = vmatprep.subr.mxu0 0.0
    %1356 = vmatpush1.msra.mxu0 0.0
    %1357 = vmatprep.subr.mxu0 0.0
    %1358 = vmatpush1.msra.mxu0 0.0
    %1359 = vmatprep.subr.mxu0 0.0
    %1360 = vmatpush1.msra.mxu0 0.0
    %1361 = vmatprep.subr.mxu0 0.0
    %1362 = vmatpush1.msra.mxu0 0.0
    %1363 = vmatprep.subr.mxu0 0.0
    %1364 = vmatpush1.msra.mxu0 0.0
    %1365 = vmatprep.subr.mxu0 0.0
    %1366 = vmatpush1.msra.mxu0 0.0
    %1367 = vmatprep.subr.mxu0 0.0
    %1368 = vmatpush1.msra.mxu0 0.0
    %1369 = vmatprep.subr.mxu0 0.0
    %1370 = vmatpush1.msra.mxu0 0.0
    %1371 = vmatprep.subr.mxu0 0.0
    %1372 = vmatpush1.msra.mxu0 0.0
    %1373 = vmatprep.mubr.f32.mxu0 0.0
    %1374 = vmatmul.mubr.f32.gmra.mrb[0].mxu0 %v1304
    %v1375 = vpop.f32.mrb[0].mxu0
    %v1376 = vadd.f32 0.0, %v1375
    %v1377 = vpop.f32.mrb[0].mxu0
    %v1378 = vadd.f32 0.0, %v1377
    %1379 = vdwg.mxu0
    %1380 = vmatprep.subr.mxu0 %v389
    %1381 = vmatpush1.msra.mxu0 %v388
    %1382 = vmatprep.subr.mxu0 %v393
    %1383 = vmatpush1.msra.mxu0 %v392
    %1384 = vmatprep.subr.mxu0 %v397
    %1385 = vmatpush1.msra.mxu0 %v396
    %1386 = vmatprep.subr.mxu0 %v401
    %1387 = vmatpush1.msra.mxu0 %v400
    %1388 = vmatprep.subr.mxu0 %v405
    %1389 = vmatpush1.msra.mxu0 %v404
    %1390 = vmatprep.subr.mxu0 %v409
    %1391 = vmatpush1.msra.mxu0 %v408
    %1392 = vmatprep.subr.mxu0 %v413
    %1393 = vmatpush1.msra.mxu0 %v412
    %1394 = vmatprep.subr.mxu0 %v417
    %1395 = vmatpush1.msra.mxu0 %v416
    %1396 = vmatprep.subr.mxu0 %v421
    %1397 = vmatpush1.msra.mxu0 %v420
    %1398 = vmatprep.subr.mxu0 %v425
    %1399 = vmatpush1.msra.mxu0 %v424
    %1400 = vmatprep.subr.mxu0 %v429
    %1401 = vmatpush1.msra.mxu0 %v428
    %1402 = vmatprep.subr.mxu0 %v433
    %1403 = vmatpush1.msra.mxu0 %v432
    %1404 = vmatprep.subr.mxu0 %v437
    %1405 = vmatpush1.msra.mxu0 %v436
    %1406 = vmatprep.subr.mxu0 %v441
    %1407 = vmatpush1.msra.mxu0 %v440
    %1408 = vmatprep.subr.mxu0 %v445
    %1409 = vmatpush1.msra.mxu0 %v444
    %1410 = vmatprep.subr.mxu0 %v449
    %1411 = vmatpush1.msra.mxu0 %v448
    %1412 = vmatprep.subr.mxu0 0.0
    %1413 = vmatpush1.msra.mxu0 0.0
    %1414 = vmatprep.subr.mxu0 0.0
    %1415 = vmatpush1.msra.mxu0 0.0
    %1416 = vmatprep.subr.mxu0 0.0
    %1417 = vmatpush1.msra.mxu0 0.0
    %1418 = vmatprep.subr.mxu0 0.0
    %1419 = vmatpush1.msra.mxu0 0.0
    %1420 = vmatprep.subr.mxu0 0.0
    %1421 = vmatpush1.msra.mxu0 0.0
    %1422 = vmatprep.subr.mxu0 0.0
    %1423 = vmatpush1.msra.mxu0 0.0
    %1424 = vmatprep.subr.mxu0 0.0
    %1425 = vmatpush1.msra.mxu0 0.0
    %1426 = vmatprep.subr.mxu0 0.0
    %1427 = vmatpush1.msra.mxu0 0.0
    %1428 = vmatprep.subr.mxu0 0.0
    %1429 = vmatpush1.msra.mxu0 0.0
    %1430 = vmatprep.subr.mxu0 0.0
    %1431 = vmatpush1.msra.mxu0 0.0
    %1432 = vmatprep.subr.mxu0 0.0
    %1433 = vmatpush1.msra.mxu0 0.0
    %1434 = vmatprep.subr.mxu0 0.0
    %1435 = vmatpush1.msra.mxu0 0.0
    %1436 = vmatprep.subr.mxu0 0.0
    %1437 = vmatpush1.msra.mxu0 0.0
    %1438 = vmatprep.subr.mxu0 0.0
    %1439 = vmatpush1.msra.mxu0 0.0
    %1440 = vmatprep.subr.mxu0 0.0
    %1441 = vmatpush1.msra.mxu0 0.0
    %1442 = vmatprep.subr.mxu0 0.0
    %1443 = vmatpush1.msra.mxu0 0.0
    %1444 = vmatprep.mubr.f32.mxu0 0.0
    %1445 = vmatmul.mubr.f32.gmra.mrb[0].mxu0 %v1304
    %v1446 = vpop.f32.mrb[0].mxu0
    %v1447 = vadd.f32 0.0, %v1446
    %v1448 = vpop.f32.mrb[0].mxu0
    %v1449 = vadd.f32 0.0, %v1448
    %1450 = vdwg.mxu0
    %v1451 = vadd.f32 %v1305, %v1376
    %v1452 = vadd.f32 %v1306, %v1378
    %v1453 = vadd.f32 %v1307, %v1447
    %v1454 = vadd.f32 %v1308, %v1449
    %v1455 = vmul.f32 %v1451, 0.5
    %v1456 = vmul.f32 %v1452, 0.5
    %v1457 = vmul.f32 %v1453, 0.5
    %v1458 = vtanh.pop %v1455
    %v1459 = vtanh.pop %v1456
    %v1460 = vtanh.pop %v1457
    %v1461 = vadd.f32 %v1458, 1.0
    %v1462 = vadd.f32 %v1459, 1.0
    %v1463 = vadd.f32 %v1460, 1.0
    %v1464 = vmul.f32 %v1461, 0.5
    %v1465 = vmul.f32 %v1462, 0.5
    %v1466 = vmul.f32 %v1463, 0.5
    %v1467 = vtanh.pop %v1454
    %v1468 = vmul.f32 %v1465, %v1302
    %v1469 = vmul.f32 %v1464, %v1467
    %v1470 = vadd.f32 %v1468, %v1469
    %v1471 = vtanh.pop %v1470
    %v1472 = vmul.f32 %v1466, %v1471
    %v1473 = vld [vmem:[#allocation2 + $0xe0] sm:$0xff]
    %v1474 = vld [vmem:[#allocation2 + $0xe8] sm:$0xff]
    %v1475 = vld [vmem:[#allocation2 + $0xf0] sm:$0xff]
    %v1476 = vld [vmem:[#allocation2 + $0xf8] sm:$0xff]
    %1477 = vmatprep.subr.mxu0 %v387
    %1478 = vmatpush1.msra.mxu0 %v386
    %1479 = vmatprep.subr.mxu0 %v391
    %1480 = vmatpush1.msra.mxu0 %v390
    %1481 = vmatprep.subr.mxu0 %v395
    %1482 = vmatpush1.msra.mxu0 %v394
    %1483 = vmatprep.subr.mxu0 %v399
    %1484 = vmatpush1.msra.mxu0 %v398
    %1485 = vmatprep.subr.mxu0 %v403
    %1486 = vmatpush1.msra.mxu0 %v402
    %1487 = vmatprep.subr.mxu0 %v407
    %1488 = vmatpush1.msra.mxu0 %v406
    %1489 = vmatprep.subr.mxu0 %v411
    %1490 = vmatpush1.msra.mxu0 %v410
    %1491 = vmatprep.subr.mxu0 %v415
    %1492 = vmatpush1.msra.mxu0 %v414
    %1493 = vmatprep.subr.mxu0 %v419
    %1494 = vmatpush1.msra.mxu0 %v418
    %1495 = vmatprep.subr.mxu0 %v423
    %1496 = vmatpush1.msra.mxu0 %v422
    %1497 = vmatprep.subr.mxu0 %v427
    %1498 = vmatpush1.msra.mxu0 %v426
    %1499 = vmatprep.subr.mxu0 %v431
    %1500 = vmatpush1.msra.mxu0 %v430
    %1501 = vmatprep.subr.mxu0 %v435
    %1502 = vmatpush1.msra.mxu0 %v434
    %1503 = vmatprep.subr.mxu0 %v439
    %1504 = vmatpush1.msra.mxu0 %v438
    %1505 = vmatprep.subr.mxu0 %v443
    %1506 = vmatpush1.msra.mxu0 %v442
    %1507 = vmatprep.subr.mxu0 %v447
    %1508 = vmatpush1.msra.mxu0 %v446
    %1509 = vmatprep.subr.mxu0 0.0
    %1510 = vmatpush1.msra.mxu0 0.0
    %1511 = vmatprep.subr.mxu0 0.0
    %1512 = vmatpush1.msra.mxu0 0.0
    %1513 = vmatprep.subr.mxu0 0.0
    %1514 = vmatpush1.msra.mxu0 0.0
    %1515 = vmatprep.subr.mxu0 0.0
    %1516 = vmatpush1.msra.mxu0 0.0
    %1517 = vmatprep.subr.mxu0 0.0
    %1518 = vmatpush1.msra.mxu0 0.0
    %1519 = vmatprep.subr.mxu0 0.0
    %1520 = vmatpush1.msra.mxu0 0.0
    %1521 = vmatprep.subr.mxu0 0.0
    %1522 = vmatpush1.msra.mxu0 0.0
    %1523 = vmatprep.subr.mxu0 0.0
    %1524 = vmatpush1.msra.mxu0 0.0
    %1525 = vmatprep.subr.mxu0 0.0
    %1526 = vmatpush1.msra.mxu0 0.0
    %1527 = vmatprep.subr.mxu0 0.0
    %1528 = vmatpush1.msra.mxu0 0.0
    %1529 = vmatprep.subr.mxu0 0.0
    %1530 = vmatpush1.msra.mxu0 0.0
    %1531 = vmatprep.subr.mxu0 0.0
    %1532 = vmatpush1.msra.mxu0 0.0
    %1533 = vmatprep.subr.mxu0 0.0
    %1534 = vmatpush1.msra.mxu0 0.0
    %1535 = vmatprep.subr.mxu0 0.0
    %1536 = vmatpush1.msra.mxu0 0.0
    %1537 = vmatprep.subr.mxu0 0.0
    %1538 = vmatpush1.msra.mxu0 0.0
    %1539 = vmatprep.subr.mxu0 0.0
    %1540 = vmatpush1.msra.mxu0 0.0
    %1541 = vmatprep.mubr.f32.mxu0 0.0
    %1542 = vmatmul.mubr.f32.gmra.mrb[0].mxu0 %v1472
    %v1543 = vpop.f32.mrb[0].mxu0
    %v1544 = vadd.f32 0.0, %v1543
    %v1545 = vpop.f32.mrb[0].mxu0
    %v1546 = vadd.f32 0.0, %v1545
    %1547 = vdwg.mxu0
    %1548 = vmatprep.subr.mxu0 %v389
    %1549 = vmatpush1.msra.mxu0 %v388
    %1550 = vmatprep.subr.mxu0 %v393
    %1551 = vmatpush1.msra.mxu0 %v392
    %1552 = vmatprep.subr.mxu0 %v397
    %1553 = vmatpush1.msra.mxu0 %v396
    %1554 = vmatprep.subr.mxu0 %v401
    %1555 = vmatpush1.msra.mxu0 %v400
    %1556 = vmatprep.subr.mxu0 %v405
    %1557 = vmatpush1.msra.mxu0 %v404
    %1558 = vmatprep.subr.mxu0 %v409
    %1559 = vmatpush1.msra.mxu0 %v408
    %1560 = vmatprep.subr.mxu0 %v413
    %1561 = vmatpush1.msra.mxu0 %v412
    %1562 = vmatprep.subr.mxu0 %v417
    %1563 = vmatpush1.msra.mxu0 %v416
    %1564 = vmatprep.subr.mxu0 %v421
    %1565 = vmatpush1.msra.mxu0 %v420
    %1566 = vmatprep.subr.mxu0 %v425
    %1567 = vmatpush1.msra.mxu0 %v424
    %1568 = vmatprep.subr.mxu0 %v429
    %1569 = vmatpush1.msra.mxu0 %v428
    %1570 = vmatprep.subr.mxu0 %v433
    %1571 = vmatpush1.msra.mxu0 %v432
    %1572 = vmatprep.subr.mxu0 %v437
    %1573 = vmatpush1.msra.mxu0 %v436
    %1574 = vmatprep.subr.mxu0 %v441
    %1575 = vmatpush1.msra.mxu0 %v440
    %1576 = vmatprep.subr.mxu0 %v445
    %1577 = vmatpush1.msra.mxu0 %v444
    %1578 = vmatprep.subr.mxu0 %v449
    %1579 = vmatpush1.msra.mxu0 %v448
    %1580 = vmatprep.subr.mxu0 0.0
    %1581 = vmatpush1.msra.mxu0 0.0
    %1582 = vmatprep.subr.mxu0 0.0
    %1583 = vmatpush1.msra.mxu0 0.0
    %1584 = vmatprep.subr.mxu0 0.0
    %1585 = vmatpush1.msra.mxu0 0.0
    %1586 = vmatprep.subr.mxu0 0.0
    %1587 = vmatpush1.msra.mxu0 0.0
    %1588 = vmatprep.subr.mxu0 0.0
    %1589 = vmatpush1.msra.mxu0 0.0
    %1590 = vmatprep.subr.mxu0 0.0
    %1591 = vmatpush1.msra.mxu0 0.0
    %1592 = vmatprep.subr.mxu0 0.0
    %1593 = vmatpush1.msra.mxu0 0.0
    %1594 = vmatprep.subr.mxu0 0.0
    %1595 = vmatpush1.msra.mxu0 0.0
    %1596 = vmatprep.subr.mxu0 0.0
    %1597 = vmatpush1.msra.mxu0 0.0
    %1598 = vmatprep.subr.mxu0 0.0
    %1599 = vmatpush1.msra.mxu0 0.0
    %1600 = vmatprep.subr.mxu0 0.0
    %1601 = vmatpush1.msra.mxu0 0.0
    %1602 = vmatprep.subr.mxu0 0.0
    %1603 = vmatpush1.msra.mxu0 0.0
    %1604 = vmatprep.subr.mxu0 0.0
    %1605 = vmatpush1.msra.mxu0 0.0
    %1606 = vmatprep.subr.mxu0 0.0
    %1607 = vmatpush1.msra.mxu0 0.0
    %1608 = vmatprep.subr.mxu0 0.0
    %1609 = vmatpush1.msra.mxu0 0.0
    %1610 = vmatprep.subr.mxu0 0.0
    %1611 = vmatpush1.msra.mxu0 0.0
    %1612 = vmatprep.mubr.f32.mxu0 0.0
    %1613 = vmatmul.mubr.f32.gmra.mrb[0].mxu0 %v1472
    %v1614 = vpop.f32.mrb[0].mxu0
    %v1615 = vadd.f32 0.0, %v1614
    %v1616 = vpop.f32.mrb[0].mxu0
    %v1617 = vadd.f32 0.0, %v1616
    %1618 = vdwg.mxu0
    %v1619 = vadd.f32 %v1473, %v1544
    %v1620 = vadd.f32 %v1474, %v1546
    %v1621 = vadd.f32 %v1475, %v1615
    %v1622 = vadd.f32 %v1476, %v1617
    %v1623 = vmul.f32 %v1619, 0.5
    %v1624 = vmul.f32 %v1620, 0.5
    %v1625 = vmul.f32 %v1621, 0.5
    %v1626 = vtanh.pop %v1623
    %v1627 = vtanh.pop %v1624
    %v1628 = vtanh.pop %v1625
    %v1629 = vadd.f32 %v1626, 1.0
    %v1630 = vadd.f32 %v1627, 1.0
    %v1631 = vadd.f32 %v1628, 1.0
    %v1632 = vmul.f32 %v1629, 0.5
    %v1633 = vmul.f32 %v1630, 0.5
    %v1634 = vmul.f32 %v1631, 0.5
    %v1635 = vtanh.pop %v1622
    %v1636 = vmul.f32 %v1633, %v1470
    %v1637 = vmul.f32 %v1632, %v1635
    %v1638 = vadd.f32 %v1636, %v1637
    %v1639 = vtanh.pop %v1638
    %v1640 = vmul.f32 %v1634, %v1639
    %v1641 = vld [vmem:[%s3 + $0x4] sm:$0x1]
    %v1642 = vld [vmem:[%s3 + $0x5] sm:$0x1]
    %v1643 = vld [vmem:[#allocation5] sm:$0xff]
    %v1644 = vld [vmem:[#allocation5 + $0x8] sm:$0xff]
    %v1645 = vld [vmem:[#allocation5 + $0x10] sm:$0xff]
    %v1646 = vld [vmem:[#allocation5 + $0x18] sm:$0xff]
    %v1647 = vld [vmem:[#allocation5 + $0x20] sm:$0xff]
    %v1648 = vld [vmem:[#allocation5 + $0x28] sm:$0xff]
    %v1649 = vld [vmem:[#allocation5 + $0x30] sm:$0xff]
    %v1650 = vld [vmem:[#allocation5 + $0x38] sm:$0xff]
    %v1651 = vld [vmem:[#allocation5 + $0x40] sm:$0xff]
    %v1652 = vld [vmem:[#allocation5 + $0x48] sm:$0xff]
    %v1653 = vld [vmem:[#allocation5 + $0x50] sm:$0xff]
    %v1654 = vld [vmem:[#allocation5 + $0x58] sm:$0xff]
    %v1655 = vld [vmem:[#allocation5 + $0x60] sm:$0xff]
    %v1656 = vld [vmem:[#allocation5 + $0x68] sm:$0xff]
    %v1657 = vld [vmem:[#allocation5 + $0x70] sm:$0xff]
    %v1658 = vld [vmem:[#allocation5 + $0x78] sm:$0xff]
    %v1660 = vlaneseq
    %v1661 = vshrl.u32 %v1660, 7
    %v1662 = vsub.s32 0, %v1661
    %v1663 = vrot.slane %v1641, %v1662
    %1665 = vmatprep.subr.mxu0 0.0
    %1666 = vmatpush1.msra.mxu0 %v1643
    %1667 = vmatprep.subr.mxu0 0.0
    %1668 = vmatpush1.msra.mxu0 %v1644
    %1669 = vmatprep.subr.mxu0 0.0
    %1670 = vmatpush1.msra.mxu0 %v1645
    %1671 = vmatprep.subr.mxu0 0.0
    %1672 = vmatpush1.msra.mxu0 %v1646
    %1673 = vmatprep.subr.mxu0 0.0
    %1674 = vmatpush1.msra.mxu0 %v1647
    %1675 = vmatprep.subr.mxu0 0.0
    %1676 = vmatpush1.msra.mxu0 %v1648
    %1677 = vmatprep.subr.mxu0 0.0
    %1678 = vmatpush1.msra.mxu0 %v1649
    %1679 = vmatprep.subr.mxu0 0.0
    %1680 = vmatpush1.msra.mxu0 %v1650
    %1681 = vmatprep.subr.mxu0 0.0
    %1682 = vmatpush1.msra.mxu0 %v1651
    %1683 = vmatprep.subr.mxu0 0.0
    %1684 = vmatpush1.msra.mxu0 %v1652
    %1685 = vmatprep.subr.mxu0 0.0
    %1686 = vmatpush1.msra.mxu0 %v1653
    %1687 = vmatprep.subr.mxu0 0.0
    %1688 = vmatpush1.msra.mxu0 %v1654
    %1689 = vmatprep.subr.mxu0 0.0
    %1690 = vmatpush1.msra.mxu0 %v1655
    %1691 = vmatprep.subr.mxu0 0.0
    %1692 = vmatpush1.msra.mxu0 %v1656
    %1693 = vmatprep.subr.mxu0 0.0
    %1694 = vmatpush1.msra.mxu0 %v1657
    %1695 = vmatprep.subr.mxu0 0.0
    %1696 = vmatpush1.msra.mxu0 %v1658
    %1697 = vmatprep.subr.mxu0 0.0
    %1698 = vmatpush1.msra.mxu0 0.0
    %1699 = vmatprep.subr.mxu0 0.0
    %1700 = vmatpush1.msra.mxu0 0.0
    %1701 = vmatprep.subr.mxu0 0.0
    %1702 = vmatpush1.msra.mxu0 0.0
    %1703 = vmatprep.subr.mxu0 0.0
    %1704 = vmatpush1.msra.mxu0 0.0
    %1705 = vmatprep.subr.mxu0 0.0
    %1706 = vmatpush1.msra.mxu0 0.0
    %1707 = vmatprep.subr.mxu0 0.0
    %1708 = vmatpush1.msra.mxu0 0.0
    %1709 = vmatprep.subr.mxu0 0.0
    %1710 = vmatpush1.msra.mxu0 0.0
    %1711 = vmatprep.subr.mxu0 0.0
    %1712 = vmatpush1.msra.mxu0 0.0
    %1713 = vmatprep.subr.mxu0 0.0
    %1714 = vmatpush1.msra.mxu0 0.0
    %1715 = vmatprep.subr.mxu0 0.0
    %1716 = vmatpush1.msra.mxu0 0.0
    %1717 = vmatprep.subr.mxu0 0.0
    %1718 = vmatpush1.msra.mxu0 0.0
    %1719 = vmatprep.subr.mxu0 0.0
    %1720 = vmatpush1.msra.mxu0 0.0
    %1721 = vmatprep.subr.mxu0 0.0
    %1722 = vmatpush1.msra.mxu0 0.0
    %1723 = vmatprep.subr.mxu0 0.0
    %1724 = vmatpush1.msra.mxu0 0.0
    %1725 = vmatprep.subr.mxu0 0.0
    %1726 = vmatpush1.msra.mxu0 0.0
    %1727 = vmatprep.subr.mxu0 0.0
    %1728 = vmatpush1.msra.mxu0 0.0
    %1729 = vmatprep.mubr.f32.mxu0 0.0
    %1730 = vmatmul.mubr.f32.gmra.mrb[0].mxu0 %v1640
    %v1731 = vpop.f32.mrb[0].mxu0
    %v1732 = vadd.f32 %v1663, %v1731
    %v1733 = vpop.f32.mrb[0].mxu0
    %1734 = vdwg.mxu0
    %vm1735 = vcmp.gt.f32.partialorder %v1732, 0.0
    %v1736 = vmul.f32 %v1732, 0.01
    %v1737 = vsel %vm1735, %v1732, %v1736
    %s1738 = scalar_lea.vmem [#allocation5], 128
    %v1739 = vld [vmem:[%s1738] sm:$0xff]
    %v1740 = vld [vmem:[%s1738 + $0x8] sm:$0xff]
    %v1741 = vld [vmem:[%s1738 + $0x10] sm:$0xff]
    %v1742 = vld [vmem:[%s1738 + $0x18] sm:$0xff]
    %v1743 = vld [vmem:[%s1738 + $0x20] sm:$0xff]
    %v1744 = vld [vmem:[%s1738 + $0x28] sm:$0xff]
    %v1745 = vld [vmem:[%s1738 + $0x30] sm:$0xff]
    %v1746 = vld [vmem:[%s1738 + $0x38] sm:$0xff]
    %v1747 = vld [vmem:[%s1738 + $0x40] sm:$0xff]
    %v1748 = vld [vmem:[%s1738 + $0x48] sm:$0xff]
    %v1749 = vld [vmem:[%s1738 + $0x50] sm:$0xff]
    %v1750 = vld [vmem:[%s1738 + $0x58] sm:$0xff]
    %v1751 = vld [vmem:[%s1738 + $0x60] sm:$0xff]
    %v1752 = vld [vmem:[%s1738 + $0x68] sm:$0xff]
    %v1753 = vld [vmem:[%s1738 + $0x70] sm:$0xff]
    %v1754 = vld [vmem:[%s1738 + $0x78] sm:$0xff]
    %v1756 = vlaneseq
    %v1757 = vshrl.u32 %v1756, 7
    %v1758 = vsub.s32 0, %v1757
    %v1759 = vrot.slane %v1642, %v1758
    %1761 = vmatprep.subr.mxu0 0.0
    %1762 = vmatpush1.msra.mxu0 %v1739
    %1763 = vmatprep.subr.mxu0 0.0
    %1764 = vmatpush1.msra.mxu0 %v1740
    %1765 = vmatprep.subr.mxu0 0.0
    %1766 = vmatpush1.msra.mxu0 %v1741
    %1767 = vmatprep.subr.mxu0 0.0
    %1768 = vmatpush1.msra.mxu0 %v1742
    %1769 = vmatprep.subr.mxu0 0.0
    %1770 = vmatpush1.msra.mxu0 %v1743
    %1771 = vmatprep.subr.mxu0 0.0
    %1772 = vmatpush1.msra.mxu0 %v1744
    %1773 = vmatprep.subr.mxu0 0.0
    %1774 = vmatpush1.msra.mxu0 %v1745
    %1775 = vmatprep.subr.mxu0 0.0
    %1776 = vmatpush1.msra.mxu0 %v1746
    %1777 = vmatprep.subr.mxu0 0.0
    %1778 = vmatpush1.msra.mxu0 %v1747
    %1779 = vmatprep.subr.mxu0 0.0
    %1780 = vmatpush1.msra.mxu0 %v1748
    %1781 = vmatprep.subr.mxu0 0.0
    %1782 = vmatpush1.msra.mxu0 %v1749
    %1783 = vmatprep.subr.mxu0 0.0
    %1784 = vmatpush1.msra.mxu0 %v1750
    %1785 = vmatprep.subr.mxu0 0.0
    %1786 = vmatpush1.msra.mxu0 %v1751
    %1787 = vmatprep.subr.mxu0 0.0
    %1788 = vmatpush1.msra.mxu0 %v1752
    %1789 = vmatprep.subr.mxu0 0.0
    %1790 = vmatpush1.msra.mxu0 %v1753
    %1791 = vmatprep.subr.mxu0 0.0
    %1792 = vmatpush1.msra.mxu0 %v1754
    %1793 = vmatprep.subr.mxu0 0.0
    %1794 = vmatpush1.msra.mxu0 0.0
    %1795 = vmatprep.subr.mxu0 0.0
    %1796 = vmatpush1.msra.mxu0 0.0
    %1797 = vmatprep.subr.mxu0 0.0
    %1798 = vmatpush1.msra.mxu0 0.0
    %1799 = vmatprep.subr.mxu0 0.0
    %1800 = vmatpush1.msra.mxu0 0.0
    %1801 = vmatprep.subr.mxu0 0.0
    %1802 = vmatpush1.msra.mxu0 0.0
    %1803 = vmatprep.subr.mxu0 0.0
    %1804 = vmatpush1.msra.mxu0 0.0
    %1805 = vmatprep.subr.mxu0 0.0
    %1806 = vmatpush1.msra.mxu0 0.0
    %1807 = vmatprep.subr.mxu0 0.0
    %1808 = vmatpush1.msra.mxu0 0.0
    %1809 = vmatprep.subr.mxu0 0.0
    %1810 = vmatpush1.msra.mxu0 0.0
    %1811 = vmatprep.subr.mxu0 0.0
    %1812 = vmatpush1.msra.mxu0 0.0
    %1813 = vmatprep.subr.mxu0 0.0
    %1814 = vmatpush1.msra.mxu0 0.0
    %1815 = vmatprep.subr.mxu0 0.0
    %1816 = vmatpush1.msra.mxu0 0.0
    %1817 = vmatprep.subr.mxu0 0.0
    %1818 = vmatpush1.msra.mxu0 0.0
    %1819 = vmatprep.subr.mxu0 0.0
    %1820 = vmatpush1.msra.mxu0 0.0
    %1821 = vmatprep.subr.mxu0 0.0
    %1822 = vmatpush1.msra.mxu0 0.0
    %1823 = vmatprep.subr.mxu0 0.0
    %1824 = vmatpush1.msra.mxu0 0.0
    %1825 = vmatprep.mubr.f32.mxu0 0.0
    %1826 = vmatmul.mubr.f32.gmra.mrb[0].mxu0 %v1737
    %v1827 = vpop.f32.mrb[0].mxu0
    %v1828 = vadd.f32 %v1759, %v1827
    %v1829 = vpop.f32.mrb[0].mxu0
    %1830 = vdwg.mxu0
    %vm1831 = vcmp.gt.f32.partialorder %v1828, 0.0
    %v1832 = vmul.f32 %v1828, 0.01
    %v1833 = vsel %vm1831, %v1828, %v1832
    %vm1834 = vcmask 31744
    %1835 = vst.msk [vmem:[%s5] sm:$0xff] %vm1834, %v1833
    // Predicated region
    $region30: #{model_forward.1} parent=1 // pred_check
      _
    $region31: #{model_forward.1} parent=1 // pred_check_branch
      %1837 = sbr.rel (0) target = $region33
    $region32: #{model_forward.1} parent=1 // pred_region
      _
    $region33: #{model_forward.1} parent=1 // pred_fallthru
      _
    // Predicated region
    $region34: #{model_forward.1} parent=1 // pred_check
      _
    $region35: #{model_forward.1} parent=1 // pred_check_branch
      %1839 = sbr.rel (0) target = $region37
    $region36: #{model_forward.1} parent=1 // pred_region
      _
    $region37: #{model_forward.1} parent=1 // pred_fallthru
      _
    %1840 = vsyncpa [#allocation4], 1
    %1841 = vsyncpa [#allocation6], 1

</llo_original>
